<compile_context>
chip_gen: v5e
topology: v5e:2x2
jax: 0.10.0
libtpu: 0.0.40
codegen_flags: <defaults>
</compile_context>

<pallas_src>
import functools

import jax
import jax.numpy as jnp
from jax.experimental import pallas as pl
from jax.experimental.pallas import tpu as pltpu

NEG_PAD = -1e30  # padding logit value; exp(NEG_PAD - max) underflows to 0 in f32
LANE = 128
SUBLANE = 8


def _round_up(n, m):
    return ((n + m - 1) // m) * m


def _pad2d(a, rows, cols, fill=0.0):
    r, c = a.shape
    return jnp.pad(a, ((0, rows - r), (0, cols - c)), constant_values=fill)


# ---------------------------------------------------------------------------
# Kernel: one batch tile, all three SVD layers + ReLU + log_softmax in VMEM.
# ---------------------------------------------------------------------------
def net_kernel(
    x_ref,
    v1_ref, u1t_ref, b1_ref,
    v2_ref, u2t_ref, b2_ref,
    v3_ref, u3t_ref, b3_ref,
    out_ref,
):
    x = x_ref[...]                                                     # (TB, 896)

    # fc1: SVDLinear(784 -> 512) + ReLU   (diag(S) pre-folded into UtS)
    h = jnp.dot(x, v1_ref[...], preferred_element_type=jnp.float32)   # (TB, r1)
    h = jnp.dot(h, u1t_ref[...], preferred_element_type=jnp.float32)  # (TB, 512)
    h = jnp.maximum(h + b1_ref[...], 0.0)

    # fc2: SVDLinear(512 -> 128) + ReLU
    h = jnp.dot(h, v2_ref[...], preferred_element_type=jnp.float32)   # (TB, r2)
    h = jnp.dot(h, u2t_ref[...], preferred_element_type=jnp.float32)  # (TB, 128)
    h = jnp.maximum(h + b2_ref[...], 0.0)

    # fc3: SVDLinear(128 -> 10), padded lane-dense to 128 output columns
    h = jnp.dot(h, v3_ref[...], preferred_element_type=jnp.float32)   # (TB, r3p)
    h = jnp.dot(h, u3t_ref[...], preferred_element_type=jnp.float32)  # (TB, 128)
    logits = h + b3_ref[...]        # cols >= 10 carry NEG_PAD -> vanish in softmax

    # log_softmax along dim=1 (padded columns contribute exp(~-1e30) == 0)
    m = jnp.max(logits, axis=1, keepdims=True)
    lse = m + jnp.log(jnp.sum(jnp.exp(logits - m), axis=1, keepdims=True))
    out_ref[...] = logits - lse


# ---------------------------------------------------------------------------
# One-time parameter transform: fold diag(S) into U.T, pad to lane multiples.
# ---------------------------------------------------------------------------
def prepare_params(params):
    """params: tuple of (U, S, V, bias) per layer with PyTorch SVDLinear shapes
       U:(out,r)  S:(r,)  V:(in,r)  bias:(out,).
       Returns tuple of (V_pad, UtS_pad, bias_pad[1,:]) per layer."""
    prepared = []
    n_layers = len(params)
    for idx, (U, S, V, b) in enumerate(params):
        in_f, r = V.shape
        out_f = U.shape[0]
        in_pad = _round_up(in_f, LANE)
        r_pad = _round_up(r, LANE)
        out_pad = _round_up(out_f, LANE)

        uts = S[:, None] * U.T                      # (r, out), diag(S) folded in
        V_p = _pad2d(V.astype(jnp.float32), in_pad, r_pad)
        uts_p = _pad2d(uts.astype(jnp.float32), r_pad, out_pad)

        is_last = idx == n_layers - 1
        fill = NEG_PAD if is_last else 0.0          # hidden pads: 0 (dead after ReLU)
        b_p = jnp.pad(b.astype(jnp.float32), (0, out_pad - out_f),
                      constant_values=fill)[None, :]
        prepared.append((V_p, uts_p, b_p))
    return tuple(prepared)


# ---------------------------------------------------------------------------
# Wrapper
# ---------------------------------------------------------------------------
@jax.jit
def net_forward(x_nchw, prepared):
    """x_nchw: (B, 1, 28, 28) float32.  prepared: output of prepare_params."""
    bs = x_nchw.shape[0]
    x = x_nchw.reshape(bs, -1)                       # x.view(bs, -1) -> (B, 784)

    (v1, u1t, b1), (v2, u2t, b2), (v3, u3t, b3) = prepared
    in_pad = v1.shape[0]                             # 896
    out_pad = b3.shape[1]                            # 128

    # Batch tile: MXU-sized (256) for big batches, tiny sublane-aligned tile otherwise.
    tb = 256 if bs >= 256 else _round_up(bs, SUBLANE)
    b_pad = _round_up(bs, tb)
    x = jnp.pad(x, ((0, b_pad - bs), (0, in_pad - x.shape[1])))

    act_spec = pl.BlockSpec((tb, in_pad), lambda i: (i, 0))
    out_spec = pl.BlockSpec((tb, out_pad), lambda i: (i, 0))
    resident = lambda arr: pl.BlockSpec(arr.shape, lambda i: (0, 0))

    out = pl.pallas_call(
        net_kernel,
        out_shape=jax.ShapeDtypeStruct((b_pad, out_pad), jnp.float32),
        grid=(b_pad // tb,),
        in_specs=[
            act_spec,
            resident(v1), resident(u1t), resident(b1),
            resident(v2), resident(u2t), resident(b2),
            resident(v3), resident(u3t), resident(b3),
        ],
        out_specs=out_spec,
        compiler_params=pltpu.CompilerParams(
            dimension_semantics=("parallel",),
            vmem_limit_bytes=32 << 20,
        ),
    )(x, v1, u1t, b1, v2, u2t, b2, v3, u3t, b3)

    return out[:bs, :10]


# ---------------------------------------------------------------------------
# Reference + synthetic params
# ---------------------------------------------------------------------------
def make_svd_linear_params(key, in_features, out_features, rank_ratio=1.0,
                           dtype=jnp.float32):
    """Deterministic synthetic init matching SVDLinear.__init__ shapes."""
    full_rank = min(in_features, out_features)
    rank = max(1, int(full_rank * rank_ratio))
    ku, ks, kv, kb = jax.random.split(key, 4)
    scale = 1.0 / jnp.sqrt(jnp.float32(in_features))
    U = (jax.random.normal(ku, (out_features, rank)) * scale).astype(dtype)
    S = (jnp.abs(jax.random.normal(ks, (rank,))) + 0.1).astype(dtype)
    V = (jax.random.normal(kv, (in_features, rank)) * scale).astype(dtype)
    bias = (jax.random.normal(kb, (out_features,)) * scale).astype(dtype)
    return U, S, V, bias


def net_forward_ref(x_nchw, params):
    """Pure-JAX reference matching the PyTorch forward semantics."""
    bs = x_nchw.shape[0]
    x = x_nchw.reshape(bs, -1)
    (U1, S1, V1, b1), (U2, S2, V2, b2), (U3, S3, V3, b3) = params
    x = x @ V1 @ jnp.diag(S1) @ U1.T + b1
    x = jnp.maximum(x, 0.0)
    x = x @ V2 @ jnp.diag(S2) @ U2.T + b2
    x = jnp.maximum(x, 0.0)
    x = x @ V3 @ jnp.diag(S3) @ U3.T + b3
    return jax.nn.log_softmax(x, axis=1)


if __name__ == "__main__":
    key = jax.random.PRNGKey(0)
    kx, k1, k2, k3 = jax.random.split(key, 4)

    rank_ratio = 1.0
    params = (
        make_svd_linear_params(k1, 28 * 28, 512, rank_ratio),
        make_svd_linear_params(k2, 512, 128, rank_ratio),
        make_svd_linear_params(k3, 128, 10, rank_ratio),
    )
    prepared = prepare_params(params)                # one-time transform

    batch = 8
    x = jax.random.normal(kx, (batch, 1, 28, 28), dtype=jnp.float32)

    out = net_forward(x, prepared)
    out = jax.block_until_ready(out)

    ref = net_forward_ref(x, params)
    assert out.shape == (batch, 10)
    assert jnp.allclose(out, ref, atol=1e-4, rtol=1e-4), "mismatch vs JAX reference"

    print("KERNEL_OK")
</pallas_src>

<mosaic_0001>
module attributes {stable_mosaic.version = 11 : i64} {
  func.func @net_kernel(%arg0: i32, %arg1: memref<8x896xf32, #tpu.memory_space<vmem>>, %arg2: memref<896x512xf32, #tpu.memory_space<vmem>>, %arg3: memref<512x512xf32, #tpu.memory_space<vmem>>, %arg4: memref<1x512xf32, #tpu.memory_space<vmem>>, %arg5: memref<512x128xf32, #tpu.memory_space<vmem>>, %arg6: memref<128x128xf32, #tpu.memory_space<vmem>>, %arg7: memref<1x128xf32, #tpu.memory_space<vmem>>, %arg8: memref<128x128xf32, #tpu.memory_space<vmem>>, %arg9: memref<128x128xf32, #tpu.memory_space<vmem>>, %arg10: memref<1x128xf32, #tpu.memory_space<vmem>>, %arg11: memref<8x128xf32, #tpu.memory_space<vmem>>) attributes {dimension_semantics = [#tpu.dimension_semantics<parallel>], iteration_bounds = array<i64: 1>, scalar_prefetch = 0 : i64, scratch_operands = 0 : i64, tpu.core_type = #tpu.core_type<tc>, window_params = [{transform_indices = @transform_0, window_bounds = array<i64: 8, 896>}, {pipeline_mode = #tpu.pipeline_mode<synchronous>, transform_indices = @transform_1, window_bounds = array<i64: 896, 512>}, {pipeline_mode = #tpu.pipeline_mode<synchronous>, transform_indices = @transform_2, window_bounds = array<i64: 512, 512>}, {pipeline_mode = #tpu.pipeline_mode<synchronous>, transform_indices = @transform_3, window_bounds = array<i64: 1, 512>}, {pipeline_mode = #tpu.pipeline_mode<synchronous>, transform_indices = @transform_4, window_bounds = array<i64: 512, 128>}, {pipeline_mode = #tpu.pipeline_mode<synchronous>, transform_indices = @transform_5, window_bounds = array<i64: 128, 128>}, {pipeline_mode = #tpu.pipeline_mode<synchronous>, transform_indices = @transform_6, window_bounds = array<i64: 1, 128>}, {pipeline_mode = #tpu.pipeline_mode<synchronous>, transform_indices = @transform_7, window_bounds = array<i64: 128, 128>}, {pipeline_mode = #tpu.pipeline_mode<synchronous>, transform_indices = @transform_8, window_bounds = array<i64: 128, 128>}, {pipeline_mode = #tpu.pipeline_mode<synchronous>, transform_indices = @transform_9, window_bounds = array<i64: 1, 128>}, {transform_indices = @transform_10, window_bounds = array<i64: 8, 128>}]} {
    %c0 = arith.constant 0 : index
    %c0_0 = arith.constant 0 : index
    %0 = vector.load %arg1[%c0, %c0_0] : memref<8x896xf32, #tpu.memory_space<vmem>>, vector<8x896xf32>
    %c0_1 = arith.constant 0 : index
    %c0_2 = arith.constant 0 : index
    %1 = vector.load %arg2[%c0_1, %c0_2] : memref<896x512xf32, #tpu.memory_space<vmem>>, vector<896x512xf32>
    %cst = arith.constant dense<0.000000e+00> : vector<8x512xf32>
    %2 = tpu.matmul %0, %1, %cst {dimension_numbers = #tpu.dot_dimension_numbers<[1], [0], [0], [1], [0, 0, 1, 1], [], []>} : vector<8x896xf32>, vector<896x512xf32>, vector<8x512xf32> -> vector<8x512xf32>
    %c0_3 = arith.constant 0 : index
    %c0_4 = arith.constant 0 : index
    %3 = vector.load %arg3[%c0_3, %c0_4] : memref<512x512xf32, #tpu.memory_space<vmem>>, vector<512x512xf32>
    %cst_5 = arith.constant dense<0.000000e+00> : vector<8x512xf32>
    %4 = tpu.matmul %2, %3, %cst_5 {dimension_numbers = #tpu.dot_dimension_numbers<[1], [0], [0], [1], [0, 0, 1, 1], [], []>} : vector<8x512xf32>, vector<512x512xf32>, vector<8x512xf32> -> vector<8x512xf32>
    %c0_6 = arith.constant 0 : index
    %c0_7 = arith.constant 0 : index
    %5 = vector.load %arg4[%c0_6, %c0_7] : memref<1x512xf32, #tpu.memory_space<vmem>>, vector<1x512xf32>
    %6 = vector.broadcast %5 : vector<1x512xf32> to vector<8x512xf32>
    %7 = arith.addf %4, %6 : vector<8x512xf32>
    %cst_8 = arith.constant 0.000000e+00 : f32
    %8 = vector.broadcast %cst_8 : f32 to vector<8x512xf32>
    %9 = arith.maximumf %7, %8 : vector<8x512xf32>
    %c0_9 = arith.constant 0 : index
    %c0_10 = arith.constant 0 : index
    %10 = vector.load %arg5[%c0_9, %c0_10] : memref<512x128xf32, #tpu.memory_space<vmem>>, vector<512x128xf32>
    %cst_11 = arith.constant dense<0.000000e+00> : vector<8x128xf32>
    %11 = tpu.matmul %9, %10, %cst_11 {dimension_numbers = #tpu.dot_dimension_numbers<[1], [0], [0], [1], [0, 0, 1, 1], [], []>} : vector<8x512xf32>, vector<512x128xf32>, vector<8x128xf32> -> vector<8x128xf32>
    %c0_12 = arith.constant 0 : index
    %c0_13 = arith.constant 0 : index
    %12 = vector.load %arg6[%c0_12, %c0_13] : memref<128x128xf32, #tpu.memory_space<vmem>>, vector<128x128xf32>
    %cst_14 = arith.constant dense<0.000000e+00> : vector<8x128xf32>
    %13 = tpu.matmul %11, %12, %cst_14 {dimension_numbers = #tpu.dot_dimension_numbers<[1], [0], [0], [1], [0, 0, 1, 1], [], []>} : vector<8x128xf32>, vector<128x128xf32>, vector<8x128xf32> -> vector<8x128xf32>
    %c0_15 = arith.constant 0 : index
    %c0_16 = arith.constant 0 : index
    %14 = vector.load %arg7[%c0_15, %c0_16] : memref<1x128xf32, #tpu.memory_space<vmem>>, vector<1x128xf32>
    %15 = vector.broadcast %14 : vector<1x128xf32> to vector<8x128xf32>
    %16 = arith.addf %13, %15 : vector<8x128xf32>
    %cst_17 = arith.constant 0.000000e+00 : f32
    %17 = vector.broadcast %cst_17 : f32 to vector<8x128xf32>
    %18 = arith.maximumf %16, %17 : vector<8x128xf32>
    %c0_18 = arith.constant 0 : index
    %c0_19 = arith.constant 0 : index
    %19 = vector.load %arg8[%c0_18, %c0_19] : memref<128x128xf32, #tpu.memory_space<vmem>>, vector<128x128xf32>
    %cst_20 = arith.constant dense<0.000000e+00> : vector<8x128xf32>
    %20 = tpu.matmul %18, %19, %cst_20 {dimension_numbers = #tpu.dot_dimension_numbers<[1], [0], [0], [1], [0, 0, 1, 1], [], []>} : vector<8x128xf32>, vector<128x128xf32>, vector<8x128xf32> -> vector<8x128xf32>
    %c0_21 = arith.constant 0 : index
    %c0_22 = arith.constant 0 : index
    %21 = vector.load %arg9[%c0_21, %c0_22] : memref<128x128xf32, #tpu.memory_space<vmem>>, vector<128x128xf32>
    %cst_23 = arith.constant dense<0.000000e+00> : vector<8x128xf32>
    %22 = tpu.matmul %20, %21, %cst_23 {dimension_numbers = #tpu.dot_dimension_numbers<[1], [0], [0], [1], [0, 0, 1, 1], [], []>} : vector<8x128xf32>, vector<128x128xf32>, vector<8x128xf32> -> vector<8x128xf32>
    %c0_24 = arith.constant 0 : index
    %c0_25 = arith.constant 0 : index
    %23 = vector.load %arg10[%c0_24, %c0_25] : memref<1x128xf32, #tpu.memory_space<vmem>>, vector<1x128xf32>
    %24 = vector.broadcast %23 : vector<1x128xf32> to vector<8x128xf32>
    %25 = arith.addf %22, %24 : vector<8x128xf32>
    %cst_26 = arith.constant dense<0xFF800000> : vector<8xf32>
    %26 = vector.multi_reduction <maximumf>, %25, %cst_26 [1] : vector<8x128xf32> to vector<8xf32>
    %27 = vector.shape_cast %26 : vector<8xf32> to vector<8x1xf32>
    %28 = vector.broadcast %27 : vector<8x1xf32> to vector<8x128xf32>
    %29 = arith.subf %25, %28 : vector<8x128xf32>
    %30 = math.exp %29 : vector<8x128xf32>
    %cst_27 = arith.constant dense<0.000000e+00> : vector<8xf32>
    %31 = vector.multi_reduction <add>, %30, %cst_27 [1] : vector<8x128xf32> to vector<8xf32>
    %32 = vector.shape_cast %31 : vector<8xf32> to vector<8x1xf32>
    %33 = math.log %32 : vector<8x1xf32>
    %34 = arith.addf %27, %33 : vector<8x1xf32>
    %35 = vector.broadcast %34 : vector<8x1xf32> to vector<8x128xf32>
    %36 = arith.subf %25, %35 : vector<8x128xf32>
    %c0_28 = arith.constant 0 : index
    %c0_29 = arith.constant 0 : index
    %37 = vector.load %arg11[%c0_28, %c0_29] : memref<8x128xf32, #tpu.memory_space<vmem>>, vector<8x128xf32>
    tpu.vector_store %arg11[%c0_28, %c0_29], %36 {strides = array<i32>} : memref<8x128xf32, #tpu.memory_space<vmem>>, vector<8x128xf32>,
    return
  }
  func.func @transform_0(%arg0: i32) -> (i32, i32) {
    %c0_i32 = arith.constant 0 : i32
    %c0_i32_0 = arith.constant 0 : i32
    return %arg0, %c0_i32 : i32, i32
  }
  func.func @transform_1(%arg0: i32) -> (i32, i32) {
    %c0_i32 = arith.constant 0 : i32
    %c0_i32_0 = arith.constant 0 : i32
    %c0_i32_1 = arith.constant 0 : i32
    return %c0_i32, %c0_i32_0 : i32, i32
  }
  func.func @transform_2(%arg0: i32) -> (i32, i32) {
    %c0_i32 = arith.constant 0 : i32
    %c0_i32_0 = arith.constant 0 : i32
    %c0_i32_1 = arith.constant 0 : i32
    return %c0_i32, %c0_i32_0 : i32, i32
  }
  func.func @transform_3(%arg0: i32) -> (i32, i32) {
    %c0_i32 = arith.constant 0 : i32
    %c0_i32_0 = arith.constant 0 : i32
    %c0_i32_1 = arith.constant 0 : i32
    return %c0_i32, %c0_i32_0 : i32, i32
  }
  func.func @transform_4(%arg0: i32) -> (i32, i32) {
    %c0_i32 = arith.constant 0 : i32
    %c0_i32_0 = arith.constant 0 : i32
    %c0_i32_1 = arith.constant 0 : i32
    return %c0_i32, %c0_i32_0 : i32, i32
  }
  func.func @transform_5(%arg0: i32) -> (i32, i32) {
    %c0_i32 = arith.constant 0 : i32
    %c0_i32_0 = arith.constant 0 : i32
    %c0_i32_1 = arith.constant 0 : i32
    return %c0_i32, %c0_i32_0 : i32, i32
  }
  func.func @transform_6(%arg0: i32) -> (i32, i32) {
    %c0_i32 = arith.constant 0 : i32
    %c0_i32_0 = arith.constant 0 : i32
    %c0_i32_1 = arith.constant 0 : i32
    return %c0_i32, %c0_i32_0 : i32, i32
  }
  func.func @transform_7(%arg0: i32) -> (i32, i32) {
    %c0_i32 = arith.constant 0 : i32
    %c0_i32_0 = arith.constant 0 : i32
    %c0_i32_1 = arith.constant 0 : i32
    return %c0_i32, %c0_i32_0 : i32, i32
  }
  func.func @transform_8(%arg0: i32) -> (i32, i32) {
    %c0_i32 = arith.constant 0 : i32
    %c0_i32_0 = arith.constant 0 : i32
    %c0_i32_1 = arith.constant 0 : i32
    return %c0_i32, %c0_i32_0 : i32, i32
  }
  func.func @transform_9(%arg0: i32) -> (i32, i32) {
    %c0_i32 = arith.constant 0 : i32
    %c0_i32_0 = arith.constant 0 : i32
    %c0_i32_1 = arith.constant 0 : i32
    return %c0_i32, %c0_i32_0 : i32, i32
  }
  func.func @transform_10(%arg0: i32) -> (i32, i32) {
    %c0_i32 = arith.constant 0 : i32
    %c0_i32_0 = arith.constant 0 : i32
    return %arg0, %c0_i32 : i32, i32
  }
}

</mosaic_0001>

<llo_original>
// kernel: net_forward.1
$region0: #{net_forward.1}
  #allocation0 [shape = 'u32[]', space=smem, size = 0x4, offset = 0x4, fixed_abs, tag = 'smem constant byte address 0x4 - core index']
  #allocation1 [shape = 'u32[72,128]{1,0:T(1,128)}', space=vmem, size = 0x9000, scoped, tag = 'internal scratch']
  %s0 = inlined_call_operand.vmem [shape: f32[8,896], index: 0, kind: input, shape index: {}]
  %s1 = inlined_call_operand.hbm [shape: f32[896,512], index: 1, kind: input, shape index: {}]
  %s2 = inlined_call_operand.hbm [shape: f32[512,512], index: 2, kind: input, shape index: {}]
  %s3 = inlined_call_operand.hbm [shape: f32[1,512], index: 3, kind: input, shape index: {}]
  %s4 = inlined_call_operand.hbm [shape: f32[512,128], index: 4, kind: input, shape index: {}]
  %s5 = inlined_call_operand.hbm [shape: f32[128,128], index: 5, kind: input, shape index: {}]
  %s6 = inlined_call_operand.hbm [shape: f32[1,128], index: 6, kind: input, shape index: {}]
  %s7 = inlined_call_operand.hbm [shape: f32[128,128], index: 7, kind: input, shape index: {}]
  %s8 = inlined_call_operand.hbm [shape: f32[128,128], index: 8, kind: input, shape index: {}]
  %s9 = inlined_call_operand.hbm [shape: f32[1,128], index: 9, kind: input, shape index: {}]
  %s10 = inlined_call_operand.hbm [shape: f32[8,128], index: 10, kind: output, shape index: {}]
  %s11 = sld [smem:[#allocation0]]
  $region86: #{net_forward.1} parent=0
    _
  %s13 = ssub.s32 1, %s11
  %s14 = scalar_select 0, %s13, %s11
  $region1: #{net_forward.1} parent=0
    #allocation2 [shape = 'u8[1835008]{0}', space=vmem, size = 0x1c0000, scoped, tag = 'input window, operand 1, single buffered']
    #allocation3 [shape = 's32[1]{0}', space=sflag, size = 0x4, scoped, tag = 'scoped memory for net_forward.1']
    #allocation4 [shape = 's32[1]{0}', space=sflag, size = 0x4, scoped, tag = 'scoped memory for net_forward.1']
    #allocation5 [shape = 'u8[1048576]{0}', space=vmem, size = 0x100000, scoped, tag = 'input window, operand 2, single buffered']
    #allocation6 [shape = 's32[1]{0}', space=sflag, size = 0x4, scoped, tag = 'scoped memory for net_forward.1']
    #allocation7 [shape = 'u8[2048]{0}', space=vmem, size = 0x800, scoped, tag = 'input window, operand 3, single buffered']
    #allocation8 [shape = 'u8[262144]{0}', space=vmem, size = 0x40000, scoped, tag = 'input window, operand 4, single buffered']
    #allocation9 [shape = 's32[1]{0}', space=sflag, size = 0x4, scoped, tag = 'scoped memory for net_forward.1']
    #allocation10 [shape = 'u8[65536]{0}', space=vmem, size = 0x10000, scoped, tag = 'input window, operand 5, single buffered']
    #allocation11 [shape = 'u8[512]{0}', space=vmem, size = 0x400, scoped, tag = 'input window, operand 6, single buffered']
    #allocation12 [shape = 's32[1]{0}', space=sflag, size = 0x4, scoped, tag = 'scoped memory for net_forward.1']
    #allocation13 [shape = 'u8[65536]{0}', space=vmem, size = 0x10000, scoped, tag = 'input window, operand 7, single buffered']
    #allocation14 [shape = 'u8[65536]{0}', space=vmem, size = 0x10000, scoped, tag = 'input window, operand 8, single buffered']
    #allocation15 [shape = 's32[1]{0}', space=sflag, size = 0x4, scoped, tag = 'scoped memory for net_forward.1']
    #allocation16 [shape = 'u8[512]{0}', space=vmem, size = 0x400, scoped, tag = 'input window, operand 9, single buffered']
    #allocation17 [shape = 'u8[4096]{0}', space=vmem, size = 0x1000, scoped, tag = 'output window, operand 0, single buffered']
    %15 = vsyncpa [#allocation3], 0
    %16 = vsyncpa [#allocation6], 0
    %17 = vsyncpa [#allocation9], 0
    %18 = vsyncpa [#allocation12], 0
    %19 = vsyncpa [#allocation15], 0
    %20 = vsyncpa [#allocation4], 0
    // Predicated region
    $region2: #{net_forward.1} parent=1 // pred_check
      _
    $region3: #{net_forward.1} parent=1 // pred_check_branch
      %22 = sbr.rel (0) target = $region5
    $region4: #{net_forward.1} parent=1 // pred_region
      _
    $region5: #{net_forward.1} parent=1 // pred_fallthru
      _
    // Predicated region
    $region6: #{net_forward.1} parent=1 // pred_check
      _
    $region7: #{net_forward.1} parent=1 // pred_check_branch
      %24 = sbr.rel (0) target = $region9
    $region8: #{net_forward.1} parent=1 // pred_region
      %26 = vsyncadd [#allocation3], 0
      %s27 = sshll.u32 %s1, 4
      %s28 = int_to_ptr.hbm [resolvable:$true] %s27
      %s29 = sshll.u32 [#allocation2], 4
      %s30 = int_to_ptr.vmem [resolvable:$true] %s29
      %35 = dma.hbm_to_vmem [thread:$0]  %s28, 57344, %s30, [#allocation3], 512, 512, 32
    $region9: #{net_forward.1} parent=1 // pred_fallthru
      _
    // Predicated region
    $region10: #{net_forward.1} parent=1 // pred_check
      _
    $region11: #{net_forward.1} parent=1 // pred_check_branch
      %37 = sbr.rel (0) target = $region13
    $region12: #{net_forward.1} parent=1 // pred_region
      %39 = vsyncadd [#allocation6], 0
      %s40 = sshll.u32 %s2, 4
      %s41 = int_to_ptr.hbm [resolvable:$true] %s40
      %s42 = sshll.u32 [#allocation5], 4
      %s43 = int_to_ptr.vmem [resolvable:$true] %s42
      %48 = dma.hbm_to_vmem [thread:$0]  %s41, 32768, %s43, [#allocation6], 512, 512, 32
    $region13: #{net_forward.1} parent=1 // pred_fallthru
      _
    // Predicated region
    $region14: #{net_forward.1} parent=1 // pred_check
      _
    $region15: #{net_forward.1} parent=1 // pred_check_branch
      %50 = sbr.rel (0) target = $region17
    $region16: #{net_forward.1} parent=1 // pred_region
      %52 = vsyncadd [#allocation6], 0
      %s54 = sshll.u32 %s3, 4
      %s55 = int_to_ptr.hbm [resolvable:$true] %s54
      %s56 = sshll.u32 [#allocation7], 4
      %s57 = int_to_ptr.vmem [resolvable:$true] %s56
      %59 = dma.hbm_to_vmem [thread:$0]  %s55, 64, %s57, [#allocation6]
    $region17: #{net_forward.1} parent=1 // pred_fallthru
      _
    // Predicated region
    $region18: #{net_forward.1} parent=1 // pred_check
      _
    $region19: #{net_forward.1} parent=1 // pred_check_branch
      %61 = sbr.rel (0) target = $region21
    $region20: #{net_forward.1} parent=1 // pred_region
      %63 = vsyncadd [#allocation9], 0
      %s64 = sshll.u32 %s4, 4
      %s65 = int_to_ptr.hbm [resolvable:$true] %s64
      %s66 = sshll.u32 [#allocation8], 4
      %s67 = int_to_ptr.vmem [resolvable:$true] %s66
      %72 = dma.hbm_to_vmem [thread:$0]  %s65, 8192, %s67, [#allocation9], 128, 128, 8
    $region21: #{net_forward.1} parent=1 // pred_fallthru
      _
    // Predicated region
    $region22: #{net_forward.1} parent=1 // pred_check
      _
    $region23: #{net_forward.1} parent=1 // pred_check_branch
      %74 = sbr.rel (0) target = $region25
    $region24: #{net_forward.1} parent=1 // pred_region
      %76 = vsyncadd [#allocation9], 0
      %s77 = sshll.u32 %s5, 4
      %s78 = int_to_ptr.hbm [resolvable:$true] %s77
      %s79 = sshll.u32 [#allocation10], 4
      %s80 = int_to_ptr.vmem [resolvable:$true] %s79
      %85 = dma.hbm_to_vmem [thread:$0]  %s78, 2048, %s80, [#allocation9], 128, 128, 8
    $region25: #{net_forward.1} parent=1 // pred_fallthru
      _
    // Predicated region
    $region26: #{net_forward.1} parent=1 // pred_check
      _
    $region27: #{net_forward.1} parent=1 // pred_check_branch
      %87 = sbr.rel (0) target = $region29
    $region28: #{net_forward.1} parent=1 // pred_region
      %89 = vsyncadd [#allocation12], 0
      %s91 = sshll.u32 %s6, 4
      %s92 = int_to_ptr.hbm [resolvable:$true] %s91
      %s93 = sshll.u32 [#allocation11], 4
      %s94 = int_to_ptr.vmem [resolvable:$true] %s93
      %96 = dma.hbm_to_vmem [thread:$0]  %s92, 16, %s94, [#allocation12]
    $region29: #{net_forward.1} parent=1 // pred_fallthru
      _
    // Predicated region
    $region30: #{net_forward.1} parent=1 // pred_check
      _
    $region31: #{net_forward.1} parent=1 // pred_check_branch
      %98 = sbr.rel (0) target = $region33
    $region32: #{net_forward.1} parent=1 // pred_region
      %100 = vsyncadd [#allocation12], 0
      %s101 = sshll.u32 %s7, 4
      %s102 = int_to_ptr.hbm [resolvable:$true] %s101
      %s103 = sshll.u32 [#allocation13], 4
      %s104 = int_to_ptr.vmem [resolvable:$true] %s103
      %109 = dma.hbm_to_vmem [thread:$0]  %s102, 2048, %s104, [#allocation12], 128, 128, 8
    $region33: #{net_forward.1} parent=1 // pred_fallthru
      _
    // Predicated region
    $region34: #{net_forward.1} parent=1 // pred_check
      _
    $region35: #{net_forward.1} parent=1 // pred_check_branch
      %111 = sbr.rel (0) target = $region37
    $region36: #{net_forward.1} parent=1 // pred_region
      %113 = vsyncadd [#allocation15], 0
      %s114 = sshll.u32 %s8, 4
      %s115 = int_to_ptr.hbm [resolvable:$true] %s114
      %s116 = sshll.u32 [#allocation14], 4
      %s117 = int_to_ptr.vmem [resolvable:$true] %s116
      %122 = dma.hbm_to_vmem [thread:$0]  %s115, 2048, %s117, [#allocation15], 128, 128, 8
    $region37: #{net_forward.1} parent=1 // pred_fallthru
      _
    // Predicated region
    $region38: #{net_forward.1} parent=1 // pred_check
      _
    $region39: #{net_forward.1} parent=1 // pred_check_branch
      %124 = sbr.rel (0) target = $region41
    $region40: #{net_forward.1} parent=1 // pred_region
      %126 = vsyncadd [#allocation15], 0
      %s128 = sshll.u32 %s9, 4
      %s129 = int_to_ptr.hbm [resolvable:$true] %s128
      %s130 = sshll.u32 [#allocation16], 4
      %s131 = int_to_ptr.vmem [resolvable:$true] %s130
      %133 = dma.hbm_to_vmem [thread:$0]  %s129, 16, %s131, [#allocation15]
    $region41: #{net_forward.1} parent=1 // pred_fallthru
      _
    // Predicated region
    $region42: #{net_forward.1} parent=1 // pred_check
      _
    $region43: #{net_forward.1} parent=1 // pred_check_branch
      %135 = sbr.rel (0) target = $region45
    $region44: #{net_forward.1} parent=1 // pred_region
      %137 = dma.done [#allocation3], 57344
    $region45: #{net_forward.1} parent=1 // pred_fallthru
      _
    // Predicated region
    $region46: #{net_forward.1} parent=1 // pred_check
      _
    $region47: #{net_forward.1} parent=1 // pred_check_branch
      %139 = sbr.rel (0) target = $region49
    $region48: #{net_forward.1} parent=1 // pred_region
      %141 = dma.done [#allocation6], 32768
    $region49: #{net_forward.1} parent=1 // pred_fallthru
      _
    // Predicated region
    $region50: #{net_forward.1} parent=1 // pred_check
      _
    $region51: #{net_forward.1} parent=1 // pred_check_branch
      %143 = sbr.rel (0) target = $region53
    $region52: #{net_forward.1} parent=1 // pred_region
      %145 = dma.done [#allocation6], 64
    $region53: #{net_forward.1} parent=1 // pred_fallthru
      _
    // Predicated region
    $region54: #{net_forward.1} parent=1 // pred_check
      _
    $region55: #{net_forward.1} parent=1 // pred_check_branch
      %147 = sbr.rel (0) target = $region57
    $region56: #{net_forward.1} parent=1 // pred_region
      %149 = dma.done [#allocation9], 8192
    $region57: #{net_forward.1} parent=1 // pred_fallthru
      _
    // Predicated region
    $region58: #{net_forward.1} parent=1 // pred_check
      _
    $region59: #{net_forward.1} parent=1 // pred_check_branch
      %151 = sbr.rel (0) target = $region61
    $region60: #{net_forward.1} parent=1 // pred_region
      %153 = dma.done [#allocation9], 2048
    $region61: #{net_forward.1} parent=1 // pred_fallthru
      _
    // Predicated region
    $region62: #{net_forward.1} parent=1 // pred_check
      _
    $region63: #{net_forward.1} parent=1 // pred_check_branch
      %155 = sbr.rel (0) target = $region65
    $region64: #{net_forward.1} parent=1 // pred_region
      %157 = dma.done [#allocation12], 16
    $region65: #{net_forward.1} parent=1 // pred_fallthru
      _
    // Predicated region
    $region66: #{net_forward.1} parent=1 // pred_check
      _
    $region67: #{net_forward.1} parent=1 // pred_check_branch
      %159 = sbr.rel (0) target = $region69
    $region68: #{net_forward.1} parent=1 // pred_region
      %161 = dma.done [#allocation12], 2048
    $region69: #{net_forward.1} parent=1 // pred_fallthru
      _
    // Predicated region
    $region70: #{net_forward.1} parent=1 // pred_check
      _
    $region71: #{net_forward.1} parent=1 // pred_check_branch
      %163 = sbr.rel (0) target = $region73
    $region72: #{net_forward.1} parent=1 // pred_region
      %165 = dma.done [#allocation15], 2048
    $region73: #{net_forward.1} parent=1 // pred_fallthru
      _
    // Predicated region
    $region74: #{net_forward.1} parent=1 // pred_check
      _
    $region75: #{net_forward.1} parent=1 // pred_check_branch
      %167 = sbr.rel (0) target = $region77
    $region76: #{net_forward.1} parent=1 // pred_region
      %169 = dma.done [#allocation15], 16
    $region77: #{net_forward.1} parent=1 // pred_fallthru
      _
    %v170 = vld [vmem:[%s0] sm:$0xff]
    %v171 = vld [vmem:[%s0 + $0x8] sm:$0xff]
    %v172 = vld [vmem:[%s0 + $0x10] sm:$0xff]
    %v173 = vld [vmem:[%s0 + $0x18] sm:$0xff]
    %v174 = vld [vmem:[%s0 + $0x20] sm:$0xff]
    %v175 = vld [vmem:[%s0 + $0x28] sm:$0xff]
    %v176 = vld [vmem:[%s0 + $0x30] sm:$0xff]
    %v177 = vld [vmem:[#allocation2] sm:$0xff]
    %v178 = vld [vmem:[#allocation2 + $0x8] sm:$0xff]
    %v179 = vld [vmem:[#allocation2 + $0x10] sm:$0xff]
    %v180 = vld [vmem:[#allocation2 + $0x18] sm:$0xff]
    %v181 = vld [vmem:[#allocation2 + $0x20] sm:$0xff]
    %v182 = vld [vmem:[#allocation2 + $0x28] sm:$0xff]
    %v183 = vld [vmem:[#allocation2 + $0x30] sm:$0xff]
    %v184 = vld [vmem:[#allocation2 + $0x38] sm:$0xff]
    %v185 = vld [vmem:[#allocation2 + $0x40] sm:$0xff]
    %v186 = vld [vmem:[#allocation2 + $0x48] sm:$0xff]
    %v187 = vld [vmem:[#allocation2 + $0x50] sm:$0xff]
    %v188 = vld [vmem:[#allocation2 + $0x58] sm:$0xff]
    %v189 = vld [vmem:[#allocation2 + $0x60] sm:$0xff]
    %v190 = vld [vmem:[#allocation2 + $0x68] sm:$0xff]
    %v191 = vld [vmem:[#allocation2 + $0x70] sm:$0xff]
    %v192 = vld [vmem:[#allocation2 + $0x78] sm:$0xff]
    %v193 = vld [vmem:[#allocation2 + $0x80] sm:$0xff]
    %v194 = vld [vmem:[#allocation2 + $0x88] sm:$0xff]
    %v195 = vld [vmem:[#allocation2 + $0x90] sm:$0xff]
    %v196 = vld [vmem:[#allocation2 + $0x98] sm:$0xff]
    %v197 = vld [vmem:[#allocation2 + $0xa0] sm:$0xff]
    %v198 = vld [vmem:[#allocation2 + $0xa8] sm:$0xff]
    %v199 = vld [vmem:[#allocation2 + $0xb0] sm:$0xff]
    %v200 = vld [vmem:[#allocation2 + $0xb8] sm:$0xff]
    %v201 = vld [vmem:[#allocation2 + $0xc0] sm:$0xff]
    %v202 = vld [vmem:[#allocation2 + $0xc8] sm:$0xff]
    %v203 = vld [vmem:[#allocation2 + $0xd0] sm:$0xff]
    %v204 = vld [vmem:[#allocation2 + $0xd8] sm:$0xff]
    %v205 = vld [vmem:[#allocation2 + $0xe0] sm:$0xff]
    %v206 = vld [vmem:[#allocation2 + $0xe8] sm:$0xff]
    %v207 = vld [vmem:[#allocation2 + $0xf0] sm:$0xff]
    %v208 = vld [vmem:[#allocation2 + $0xf8] sm:$0xff]
    %v209 = vld [vmem:[#allocation2 + $0x100] sm:$0xff]
    %v210 = vld [vmem:[#allocation2 + $0x108] sm:$0xff]
    %v211 = vld [vmem:[#allocation2 + $0x110] sm:$0xff]
    %v212 = vld [vmem:[#allocation2 + $0x118] sm:$0xff]
    %v213 = vld [vmem:[#allocation2 + $0x120] sm:$0xff]
    %v214 = vld [vmem:[#allocation2 + $0x128] sm:$0xff]
    %v215 = vld [vmem:[#allocation2 + $0x130] sm:$0xff]
    %v216 = vld [vmem:[#allocation2 + $0x138] sm:$0xff]
    %v217 = vld [vmem:[#allocation2 + $0x140] sm:$0xff]
    %v218 = vld [vmem:[#allocation2 + $0x148] sm:$0xff]
    %v219 = vld [vmem:[#allocation2 + $0x150] sm:$0xff]
    %v220 = vld [vmem:[#allocation2 + $0x158] sm:$0xff]
    %v221 = vld [vmem:[#allocation2 + $0x160] sm:$0xff]
    %v222 = vld [vmem:[#allocation2 + $0x168] sm:$0xff]
    %v223 = vld [vmem:[#allocation2 + $0x170] sm:$0xff]
    %v224 = vld [vmem:[#allocation2 + $0x178] sm:$0xff]
    %v225 = vld [vmem:[#allocation2 + $0x180] sm:$0xff]
    %v226 = vld [vmem:[#allocation2 + $0x188] sm:$0xff]
    %v227 = vld [vmem:[#allocation2 + $0x190] sm:$0xff]
    %v228 = vld [vmem:[#allocation2 + $0x198] sm:$0xff]
    %v229 = vld [vmem:[#allocation2 + $0x1a0] sm:$0xff]
    %v230 = vld [vmem:[#allocation2 + $0x1a8] sm:$0xff]
    %v231 = vld [vmem:[#allocation2 + $0x1b0] sm:$0xff]
    %v232 = vld [vmem:[#allocation2 + $0x1b8] sm:$0xff]
    %v233 = vld [vmem:[#allocation2 + $0x1c0] sm:$0xff]
    %v234 = vld [vmem:[#allocation2 + $0x1c8] sm:$0xff]
    %v235 = vld [vmem:[#allocation2 + $0x1d0] sm:$0xff]
    %v236 = vld [vmem:[#allocation2 + $0x1d8] sm:$0xff]
    %v237 = vld [vmem:[#allocation2 + $0x1e0] sm:$0xff]
    %v238 = vld [vmem:[#allocation2 + $0x1e8] sm:$0xff]
    %v239 = vld [vmem:[#allocation2 + $0x1f0] sm:$0xff]
    %v240 = vld [vmem:[#allocation2 + $0x1f8] sm:$0xff]
    %v241 = vld [vmem:[#allocation2 + $0x200] sm:$0xff]
    %v242 = vld [vmem:[#allocation2 + $0x208] sm:$0xff]
    %v243 = vld [vmem:[#allocation2 + $0x210] sm:$0xff]
    %v244 = vld [vmem:[#allocation2 + $0x218] sm:$0xff]
    %v245 = vld [vmem:[#allocation2 + $0x220] sm:$0xff]
    %v246 = vld [vmem:[#allocation2 + $0x228] sm:$0xff]
    %v247 = vld [vmem:[#allocation2 + $0x230] sm:$0xff]
    %v248 = vld [vmem:[#allocation2 + $0x238] sm:$0xff]
    %v249 = vld [vmem:[#allocation2 + $0x240] sm:$0xff]
    %v250 = vld [vmem:[#allocation2 + $0x248] sm:$0xff]
    %v251 = vld [vmem:[#allocation2 + $0x250] sm:$0xff]
    %v252 = vld [vmem:[#allocation2 + $0x258] sm:$0xff]
    %v253 = vld [vmem:[#allocation2 + $0x260] sm:$0xff]
    %v254 = vld [vmem:[#allocation2 + $0x268] sm:$0xff]
    %v255 = vld [vmem:[#allocation2 + $0x270] sm:$0xff]
    %v256 = vld [vmem:[#allocation2 + $0x278] sm:$0xff]
    %v257 = vld [vmem:[#allocation2 + $0x280] sm:$0xff]
    %v258 = vld [vmem:[#allocation2 + $0x288] sm:$0xff]
    %v259 = vld [vmem:[#allocation2 + $0x290] sm:$0xff]
    %v260 = vld [vmem:[#allocation2 + $0x298] sm:$0xff]
    %v261 = vld [vmem:[#allocation2 + $0x2a0] sm:$0xff]
    %v262 = vld [vmem:[#allocation2 + $0x2a8] sm:$0xff]
    %v263 = vld [vmem:[#allocation2 + $0x2b0] sm:$0xff]
    %v264 = vld [vmem:[#allocation2 + $0x2b8] sm:$0xff]
    %v265 = vld [vmem:[#allocation2 + $0x2c0] sm:$0xff]
    %v266 = vld [vmem:[#allocation2 + $0x2c8] sm:$0xff]
    %v267 = vld [vmem:[#allocation2 + $0x2d0] sm:$0xff]
    %v268 = vld [vmem:[#allocation2 + $0x2d8] sm:$0xff]
    %v269 = vld [vmem:[#allocation2 + $0x2e0] sm:$0xff]
    %v270 = vld [vmem:[#allocation2 + $0x2e8] sm:$0xff]
    %v271 = vld [vmem:[#allocation2 + $0x2f0] sm:$0xff]
    %v272 = vld [vmem:[#allocation2 + $0x2f8] sm:$0xff]
    %v273 = vld [vmem:[#allocation2 + $0x300] sm:$0xff]
    %v274 = vld [vmem:[#allocation2 + $0x308] sm:$0xff]
    %v275 = vld [vmem:[#allocation2 + $0x310] sm:$0xff]
    %v276 = vld [vmem:[#allocation2 + $0x318] sm:$0xff]
    %v277 = vld [vmem:[#allocation2 + $0x320] sm:$0xff]
    %v278 = vld [vmem:[#allocation2 + $0x328] sm:$0xff]
    %v279 = vld [vmem:[#allocation2 + $0x330] sm:$0xff]
    %v280 = vld [vmem:[#allocation2 + $0x338] sm:$0xff]
    %v281 = vld [vmem:[#allocation2 + $0x340] sm:$0xff]
    %v282 = vld [vmem:[#allocation2 + $0x348] sm:$0xff]
    %v283 = vld [vmem:[#allocation2 + $0x350] sm:$0xff]
    %v284 = vld [vmem:[#allocation2 + $0x358] sm:$0xff]
    %v285 = vld [vmem:[#allocation2 + $0x360] sm:$0xff]
    %v286 = vld [vmem:[#allocation2 + $0x368] sm:$0xff]
    %v287 = vld [vmem:[#allocation2 + $0x370] sm:$0xff]
    %v288 = vld [vmem:[#allocation2 + $0x378] sm:$0xff]
    %v289 = vld [vmem:[#allocation2 + $0x380] sm:$0xff]
    %v290 = vld [vmem:[#allocation2 + $0x388] sm:$0xff]
    %v291 = vld [vmem:[#allocation2 + $0x390] sm:$0xff]
    %v292 = vld [vmem:[#allocation2 + $0x398] sm:$0xff]
    %v293 = vld [vmem:[#allocation2 + $0x3a0] sm:$0xff]
    %v294 = vld [vmem:[#allocation2 + $0x3a8] sm:$0xff]
    %v295 = vld [vmem:[#allocation2 + $0x3b0] sm:$0xff]
    %v296 = vld [vmem:[#allocation2 + $0x3b8] sm:$0xff]
    %v297 = vld [vmem:[#allocation2 + $0x3c0] sm:$0xff]
    %v298 = vld [vmem:[#allocation2 + $0x3c8] sm:$0xff]
    %v299 = vld [vmem:[#allocation2 + $0x3d0] sm:$0xff]
    %v300 = vld [vmem:[#allocation2 + $0x3d8] sm:$0xff]
    %v301 = vld [vmem:[#allocation2 + $0x3e0] sm:$0xff]
    %v302 = vld [vmem:[#allocation2 + $0x3e8] sm:$0xff]
    %v303 = vld [vmem:[#allocation2 + $0x3f0] sm:$0xff]
    %v304 = vld [vmem:[#allocation2 + $0x3f8] sm:$0xff]
    %v305 = vld [vmem:[#allocation2 + $0x400] sm:$0xff]
    %v306 = vld [vmem:[#allocation2 + $0x408] sm:$0xff]
    %v307 = vld [vmem:[#allocation2 + $0x410] sm:$0xff]
    %v308 = vld [vmem:[#allocation2 + $0x418] sm:$0xff]
    %v309 = vld [vmem:[#allocation2 + $0x420] sm:$0xff]
    %v310 = vld [vmem:[#allocation2 + $0x428] sm:$0xff]
    %v311 = vld [vmem:[#allocation2 + $0x430] sm:$0xff]
    %v312 = vld [vmem:[#allocation2 + $0x438] sm:$0xff]
    %v313 = vld [vmem:[#allocation2 + $0x440] sm:$0xff]
    %v314 = vld [vmem:[#allocation2 + $0x448] sm:$0xff]
    %v315 = vld [vmem:[#allocation2 + $0x450] sm:$0xff]
    %v316 = vld [vmem:[#allocation2 + $0x458] sm:$0xff]
    %v317 = vld [vmem:[#allocation2 + $0x460] sm:$0xff]
    %v318 = vld [vmem:[#allocation2 + $0x468] sm:$0xff]
    %v319 = vld [vmem:[#allocation2 + $0x470] sm:$0xff]
    %v320 = vld [vmem:[#allocation2 + $0x478] sm:$0xff]
    %v321 = vld [vmem:[#allocation2 + $0x480] sm:$0xff]
    %v322 = vld [vmem:[#allocation2 + $0x488] sm:$0xff]
    %v323 = vld [vmem:[#allocation2 + $0x490] sm:$0xff]
    %v324 = vld [vmem:[#allocation2 + $0x498] sm:$0xff]
    %v325 = vld [vmem:[#allocation2 + $0x4a0] sm:$0xff]
    %v326 = vld [vmem:[#allocation2 + $0x4a8] sm:$0xff]
    %v327 = vld [vmem:[#allocation2 + $0x4b0] sm:$0xff]
    %v328 = vld [vmem:[#allocation2 + $0x4b8] sm:$0xff]
    %v329 = vld [vmem:[#allocation2 + $0x4c0] sm:$0xff]
    %v330 = vld [vmem:[#allocation2 + $0x4c8] sm:$0xff]
    %v331 = vld [vmem:[#allocation2 + $0x4d0] sm:$0xff]
    %v332 = vld [vmem:[#allocation2 + $0x4d8] sm:$0xff]
    %v333 = vld [vmem:[#allocation2 + $0x4e0] sm:$0xff]
    %v334 = vld [vmem:[#allocation2 + $0x4e8] sm:$0xff]
    %v335 = vld [vmem:[#allocation2 + $0x4f0] sm:$0xff]
    %v336 = vld [vmem:[#allocation2 + $0x4f8] sm:$0xff]
    %v337 = vld [vmem:[#allocation2 + $0x500] sm:$0xff]
    %v338 = vld [vmem:[#allocation2 + $0x508] sm:$0xff]
    %v339 = vld [vmem:[#allocation2 + $0x510] sm:$0xff]
    %v340 = vld [vmem:[#allocation2 + $0x518] sm:$0xff]
    %v341 = vld [vmem:[#allocation2 + $0x520] sm:$0xff]
    %v342 = vld [vmem:[#allocation2 + $0x528] sm:$0xff]
    %v343 = vld [vmem:[#allocation2 + $0x530] sm:$0xff]
    %v344 = vld [vmem:[#allocation2 + $0x538] sm:$0xff]
    %v345 = vld [vmem:[#allocation2 + $0x540] sm:$0xff]
    %v346 = vld [vmem:[#allocation2 + $0x548] sm:$0xff]
    %v347 = vld [vmem:[#allocation2 + $0x550] sm:$0xff]
    %v348 = vld [vmem:[#allocation2 + $0x558] sm:$0xff]
    %v349 = vld [vmem:[#allocation2 + $0x560] sm:$0xff]
    %v350 = vld [vmem:[#allocation2 + $0x568] sm:$0xff]
    %v351 = vld [vmem:[#allocation2 + $0x570] sm:$0xff]
    %v352 = vld [vmem:[#allocation2 + $0x578] sm:$0xff]
    %v353 = vld [vmem:[#allocation2 + $0x580] sm:$0xff]
    %v354 = vld [vmem:[#allocation2 + $0x588] sm:$0xff]
    %v355 = vld [vmem:[#allocation2 + $0x590] sm:$0xff]
    %v356 = vld [vmem:[#allocation2 + $0x598] sm:$0xff]
    %v357 = vld [vmem:[#allocation2 + $0x5a0] sm:$0xff]
    %v358 = vld [vmem:[#allocation2 + $0x5a8] sm:$0xff]
    %v359 = vld [vmem:[#allocation2 + $0x5b0] sm:$0xff]
    %v360 = vld [vmem:[#allocation2 + $0x5b8] sm:$0xff]
    %v361 = vld [vmem:[#allocation2 + $0x5c0] sm:$0xff]
    %v362 = vld [vmem:[#allocation2 + $0x5c8] sm:$0xff]
    %v363 = vld [vmem:[#allocation2 + $0x5d0] sm:$0xff]
    %v364 = vld [vmem:[#allocation2 + $0x5d8] sm:$0xff]
    %v365 = vld [vmem:[#allocation2 + $0x5e0] sm:$0xff]
    %v366 = vld [vmem:[#allocation2 + $0x5e8] sm:$0xff]
    %v367 = vld [vmem:[#allocation2 + $0x5f0] sm:$0xff]
    %v368 = vld [vmem:[#allocation2 + $0x5f8] sm:$0xff]
    %v369 = vld [vmem:[#allocation2 + $0x600] sm:$0xff]
    %v370 = vld [vmem:[#allocation2 + $0x608] sm:$0xff]
    %v371 = vld [vmem:[#allocation2 + $0x610] sm:$0xff]
    %v372 = vld [vmem:[#allocation2 + $0x618] sm:$0xff]
    %v373 = vld [vmem:[#allocation2 + $0x620] sm:$0xff]
    %v374 = vld [vmem:[#allocation2 + $0x628] sm:$0xff]
    %v375 = vld [vmem:[#allocation2 + $0x630] sm:$0xff]
    %v376 = vld [vmem:[#allocation2 + $0x638] sm:$0xff]
    %v377 = vld [vmem:[#allocation2 + $0x640] sm:$0xff]
    %v378 = vld [vmem:[#allocation2 + $0x648] sm:$0xff]
    %v379 = vld [vmem:[#allocation2 + $0x650] sm:$0xff]
    %v380 = vld [vmem:[#allocation2 + $0x658] sm:$0xff]
    %v381 = vld [vmem:[#allocation2 + $0x660] sm:$0xff]
    %v382 = vld [vmem:[#allocation2 + $0x668] sm:$0xff]
    %v383 = vld [vmem:[#allocation2 + $0x670] sm:$0xff]
    %v384 = vld [vmem:[#allocation2 + $0x678] sm:$0xff]
    %v385 = vld [vmem:[#allocation2 + $0x680] sm:$0xff]
    %v386 = vld [vmem:[#allocation2 + $0x688] sm:$0xff]
    %v387 = vld [vmem:[#allocation2 + $0x690] sm:$0xff]
    %v388 = vld [vmem:[#allocation2 + $0x698] sm:$0xff]
    %v389 = vld [vmem:[#allocation2 + $0x6a0] sm:$0xff]
    %v390 = vld [vmem:[#allocation2 + $0x6a8] sm:$0xff]
    %v391 = vld [vmem:[#allocation2 + $0x6b0] sm:$0xff]
    %v392 = vld [vmem:[#allocation2 + $0x6b8] sm:$0xff]
    %v393 = vld [vmem:[#allocation2 + $0x6c0] sm:$0xff]
    %v394 = vld [vmem:[#allocation2 + $0x6c8] sm:$0xff]
    %v395 = vld [vmem:[#allocation2 + $0x6d0] sm:$0xff]
    %v396 = vld [vmem:[#allocation2 + $0x6d8] sm:$0xff]
    %v397 = vld [vmem:[#allocation2 + $0x6e0] sm:$0xff]
    %v398 = vld [vmem:[#allocation2 + $0x6e8] sm:$0xff]
    %v399 = vld [vmem:[#allocation2 + $0x6f0] sm:$0xff]
    %v400 = vld [vmem:[#allocation2 + $0x6f8] sm:$0xff]
    %v401 = vld [vmem:[#allocation2 + $0x700] sm:$0xff]
    %v402 = vld [vmem:[#allocation2 + $0x708] sm:$0xff]
    %v403 = vld [vmem:[#allocation2 + $0x710] sm:$0xff]
    %v404 = vld [vmem:[#allocation2 + $0x718] sm:$0xff]
    %v405 = vld [vmem:[#allocation2 + $0x720] sm:$0xff]
    %v406 = vld [vmem:[#allocation2 + $0x728] sm:$0xff]
    %v407 = vld [vmem:[#allocation2 + $0x730] sm:$0xff]
    %v408 = vld [vmem:[#allocation2 + $0x738] sm:$0xff]
    %v409 = vld [vmem:[#allocation2 + $0x740] sm:$0xff]
    %v410 = vld [vmem:[#allocation2 + $0x748] sm:$0xff]
    %v411 = vld [vmem:[#allocation2 + $0x750] sm:$0xff]
    %v412 = vld [vmem:[#allocation2 + $0x758] sm:$0xff]
    %v413 = vld [vmem:[#allocation2 + $0x760] sm:$0xff]
    %v414 = vld [vmem:[#allocation2 + $0x768] sm:$0xff]
    %v415 = vld [vmem:[#allocation2 + $0x770] sm:$0xff]
    %v416 = vld [vmem:[#allocation2 + $0x778] sm:$0xff]
    %v417 = vld [vmem:[#allocation2 + $0x780] sm:$0xff]
    %v418 = vld [vmem:[#allocation2 + $0x788] sm:$0xff]
    %v419 = vld [vmem:[#allocation2 + $0x790] sm:$0xff]
    %v420 = vld [vmem:[#allocation2 + $0x798] sm:$0xff]
    %v421 = vld [vmem:[#allocation2 + $0x7a0] sm:$0xff]
    %v422 = vld [vmem:[#allocation2 + $0x7a8] sm:$0xff]
    %v423 = vld [vmem:[#allocation2 + $0x7b0] sm:$0xff]
    %v424 = vld [vmem:[#allocation2 + $0x7b8] sm:$0xff]
    %v425 = vld [vmem:[#allocation2 + $0x7c0] sm:$0xff]
    %v426 = vld [vmem:[#allocation2 + $0x7c8] sm:$0xff]
    %v427 = vld [vmem:[#allocation2 + $0x7d0] sm:$0xff]
    %v428 = vld [vmem:[#allocation2 + $0x7d8] sm:$0xff]
    %v429 = vld [vmem:[#allocation2 + $0x7e0] sm:$0xff]
    %v430 = vld [vmem:[#allocation2 + $0x7e8] sm:$0xff]
    %v431 = vld [vmem:[#allocation2 + $0x7f0] sm:$0xff]
    %v432 = vld [vmem:[#allocation2 + $0x7f8] sm:$0xff]
    %v433 = vld [vmem:[#allocation2 + $0x800] sm:$0xff]
    %v434 = vld [vmem:[#allocation2 + $0x808] sm:$0xff]
    %v435 = vld [vmem:[#allocation2 + $0x810] sm:$0xff]
    %v436 = vld [vmem:[#allocation2 + $0x818] sm:$0xff]
    %v437 = vld [vmem:[#allocation2 + $0x820] sm:$0xff]
    %v438 = vld [vmem:[#allocation2 + $0x828] sm:$0xff]
    %v439 = vld [vmem:[#allocation2 + $0x830] sm:$0xff]
    %v440 = vld [vmem:[#allocation2 + $0x838] sm:$0xff]
    %v441 = vld [vmem:[#allocation2 + $0x840] sm:$0xff]
    %v442 = vld [vmem:[#allocation2 + $0x848] sm:$0xff]
    %v443 = vld [vmem:[#allocation2 + $0x850] sm:$0xff]
    %v444 = vld [vmem:[#allocation2 + $0x858] sm:$0xff]
    %v445 = vld [vmem:[#allocation2 + $0x860] sm:$0xff]
    %v446 = vld [vmem:[#allocation2 + $0x868] sm:$0xff]
    %v447 = vld [vmem:[#allocation2 + $0x870] sm:$0xff]
    %v448 = vld [vmem:[#allocation2 + $0x878] sm:$0xff]
    %v449 = vld [vmem:[#allocation2 + $0x880] sm:$0xff]
    %v450 = vld [vmem:[#allocation2 + $0x888] sm:$0xff]
    %v451 = vld [vmem:[#allocation2 + $0x890] sm:$0xff]
    %v452 = vld [vmem:[#allocation2 + $0x898] sm:$0xff]
    %v453 = vld [vmem:[#allocation2 + $0x8a0] sm:$0xff]
    %v454 = vld [vmem:[#allocation2 + $0x8a8] sm:$0xff]
    %v455 = vld [vmem:[#allocation2 + $0x8b0] sm:$0xff]
    %v456 = vld [vmem:[#allocation2 + $0x8b8] sm:$0xff]
    %v457 = vld [vmem:[#allocation2 + $0x8c0] sm:$0xff]
    %v458 = vld [vmem:[#allocation2 + $0x8c8] sm:$0xff]
    %v459 = vld [vmem:[#allocation2 + $0x8d0] sm:$0xff]
    %v460 = vld [vmem:[#allocation2 + $0x8d8] sm:$0xff]
    %v461 = vld [vmem:[#allocation2 + $0x8e0] sm:$0xff]
    %v462 = vld [vmem:[#allocation2 + $0x8e8] sm:$0xff]
    %v463 = vld [vmem:[#allocation2 + $0x8f0] sm:$0xff]
    %v464 = vld [vmem:[#allocation2 + $0x8f8] sm:$0xff]
    %v465 = vld [vmem:[#allocation2 + $0x900] sm:$0xff]
    %v466 = vld [vmem:[#allocation2 + $0x908] sm:$0xff]
    %v467 = vld [vmem:[#allocation2 + $0x910] sm:$0xff]
    %v468 = vld [vmem:[#allocation2 + $0x918] sm:$0xff]
    %v469 = vld [vmem:[#allocation2 + $0x920] sm:$0xff]
    %v470 = vld [vmem:[#allocation2 + $0x928] sm:$0xff]
    %v471 = vld [vmem:[#allocation2 + $0x930] sm:$0xff]
    %v472 = vld [vmem:[#allocation2 + $0x938] sm:$0xff]
    %v473 = vld [vmem:[#allocation2 + $0x940] sm:$0xff]
    %v474 = vld [vmem:[#allocation2 + $0x948] sm:$0xff]
    %v475 = vld [vmem:[#allocation2 + $0x950] sm:$0xff]
    %v476 = vld [vmem:[#allocation2 + $0x958] sm:$0xff]
    %v477 = vld [vmem:[#allocation2 + $0x960] sm:$0xff]
    %v478 = vld [vmem:[#allocation2 + $0x968] sm:$0xff]
    %v479 = vld [vmem:[#allocation2 + $0x970] sm:$0xff]
    %v480 = vld [vmem:[#allocation2 + $0x978] sm:$0xff]
    %v481 = vld [vmem:[#allocation2 + $0x980] sm:$0xff]
    %v482 = vld [vmem:[#allocation2 + $0x988] sm:$0xff]
    %v483 = vld [vmem:[#allocation2 + $0x990] sm:$0xff]
    %v484 = vld [vmem:[#allocation2 + $0x998] sm:$0xff]
    %v485 = vld [vmem:[#allocation2 + $0x9a0] sm:$0xff]
    %v486 = vld [vmem:[#allocation2 + $0x9a8] sm:$0xff]
    %v487 = vld [vmem:[#allocation2 + $0x9b0] sm:$0xff]
    %v488 = vld [vmem:[#allocation2 + $0x9b8] sm:$0xff]
    %v489 = vld [vmem:[#allocation2 + $0x9c0] sm:$0xff]
    %v490 = vld [vmem:[#allocation2 + $0x9c8] sm:$0xff]
    %v491 = vld [vmem:[#allocation2 + $0x9d0] sm:$0xff]
    %v492 = vld [vmem:[#allocation2 + $0x9d8] sm:$0xff]
    %v493 = vld [vmem:[#allocation2 + $0x9e0] sm:$0xff]
    %v494 = vld [vmem:[#allocation2 + $0x9e8] sm:$0xff]
    %v495 = vld [vmem:[#allocation2 + $0x9f0] sm:$0xff]
    %v496 = vld [vmem:[#allocation2 + $0x9f8] sm:$0xff]
    %v497 = vld [vmem:[#allocation2 + $0xa00] sm:$0xff]
    %v498 = vld [vmem:[#allocation2 + $0xa08] sm:$0xff]
    %v499 = vld [vmem:[#allocation2 + $0xa10] sm:$0xff]
    %v500 = vld [vmem:[#allocation2 + $0xa18] sm:$0xff]
    %v501 = vld [vmem:[#allocation2 + $0xa20] sm:$0xff]
    %v502 = vld [vmem:[#allocation2 + $0xa28] sm:$0xff]
    %v503 = vld [vmem:[#allocation2 + $0xa30] sm:$0xff]
    %v504 = vld [vmem:[#allocation2 + $0xa38] sm:$0xff]
    %v505 = vld [vmem:[#allocation2 + $0xa40] sm:$0xff]
    %v506 = vld [vmem:[#allocation2 + $0xa48] sm:$0xff]
    %v507 = vld [vmem:[#allocation2 + $0xa50] sm:$0xff]
    %v508 = vld [vmem:[#allocation2 + $0xa58] sm:$0xff]
    %v509 = vld [vmem:[#allocation2 + $0xa60] sm:$0xff]
    %v510 = vld [vmem:[#allocation2 + $0xa68] sm:$0xff]
    %v511 = vld [vmem:[#allocation2 + $0xa70] sm:$0xff]
    %v512 = vld [vmem:[#allocation2 + $0xa78] sm:$0xff]
    %v513 = vld [vmem:[#allocation2 + $0xa80] sm:$0xff]
    %v514 = vld [vmem:[#allocation2 + $0xa88] sm:$0xff]
    %v515 = vld [vmem:[#allocation2 + $0xa90] sm:$0xff]
    %v516 = vld [vmem:[#allocation2 + $0xa98] sm:$0xff]
    %v517 = vld [vmem:[#allocation2 + $0xaa0] sm:$0xff]
    %v518 = vld [vmem:[#allocation2 + $0xaa8] sm:$0xff]
    %v519 = vld [vmem:[#allocation2 + $0xab0] sm:$0xff]
    %v520 = vld [vmem:[#allocation2 + $0xab8] sm:$0xff]
    %v521 = vld [vmem:[#allocation2 + $0xac0] sm:$0xff]
    %v522 = vld [vmem:[#allocation2 + $0xac8] sm:$0xff]
    %v523 = vld [vmem:[#allocation2 + $0xad0] sm:$0xff]
    %v524 = vld [vmem:[#allocation2 + $0xad8] sm:$0xff]
    %v525 = vld [vmem:[#allocation2 + $0xae0] sm:$0xff]
    %v526 = vld [vmem:[#allocation2 + $0xae8] sm:$0xff]
    %v527 = vld [vmem:[#allocation2 + $0xaf0] sm:$0xff]
    %v528 = vld [vmem:[#allocation2 + $0xaf8] sm:$0xff]
    %v529 = vld [vmem:[#allocation2 + $0xb00] sm:$0xff]
    %v530 = vld [vmem:[#allocation2 + $0xb08] sm:$0xff]
    %v531 = vld [vmem:[#allocation2 + $0xb10] sm:$0xff]
    %v532 = vld [vmem:[#allocation2 + $0xb18] sm:$0xff]
    %v533 = vld [vmem:[#allocation2 + $0xb20] sm:$0xff]
    %v534 = vld [vmem:[#allocation2 + $0xb28] sm:$0xff]
    %v535 = vld [vmem:[#allocation2 + $0xb30] sm:$0xff]
    %v536 = vld [vmem:[#allocation2 + $0xb38] sm:$0xff]
    %v537 = vld [vmem:[#allocation2 + $0xb40] sm:$0xff]
    %v538 = vld [vmem:[#allocation2 + $0xb48] sm:$0xff]
    %v539 = vld [vmem:[#allocation2 + $0xb50] sm:$0xff]
    %v540 = vld [vmem:[#allocation2 + $0xb58] sm:$0xff]
    %v541 = vld [vmem:[#allocation2 + $0xb60] sm:$0xff]
    %v542 = vld [vmem:[#allocation2 + $0xb68] sm:$0xff]
    %v543 = vld [vmem:[#allocation2 + $0xb70] sm:$0xff]
    %v544 = vld [vmem:[#allocation2 + $0xb78] sm:$0xff]
    %v545 = vld [vmem:[#allocation2 + $0xb80] sm:$0xff]
    %v546 = vld [vmem:[#allocation2 + $0xb88] sm:$0xff]
    %v547 = vld [vmem:[#allocation2 + $0xb90] sm:$0xff]
    %v548 = vld [vmem:[#allocation2 + $0xb98] sm:$0xff]
    %v549 = vld [vmem:[#allocation2 + $0xba0] sm:$0xff]
    %v550 = vld [vmem:[#allocation2 + $0xba8] sm:$0xff]
    %v551 = vld [vmem:[#allocation2 + $0xbb0] sm:$0xff]
    %v552 = vld [vmem:[#allocation2 + $0xbb8] sm:$0xff]
    %v553 = vld [vmem:[#allocation2 + $0xbc0] sm:$0xff]
    %v554 = vld [vmem:[#allocation2 + $0xbc8] sm:$0xff]
    %v555 = vld [vmem:[#allocation2 + $0xbd0] sm:$0xff]
    %v556 = vld [vmem:[#allocation2 + $0xbd8] sm:$0xff]
    %v557 = vld [vmem:[#allocation2 + $0xbe0] sm:$0xff]
    %v558 = vld [vmem:[#allocation2 + $0xbe8] sm:$0xff]
    %v559 = vld [vmem:[#allocation2 + $0xbf0] sm:$0xff]
    %v560 = vld [vmem:[#allocation2 + $0xbf8] sm:$0xff]
    %v561 = vld [vmem:[#allocation2 + $0xc00] sm:$0xff]
    %v562 = vld [vmem:[#allocation2 + $0xc08] sm:$0xff]
    %v563 = vld [vmem:[#allocation2 + $0xc10] sm:$0xff]
    %v564 = vld [vmem:[#allocation2 + $0xc18] sm:$0xff]
    %v565 = vld [vmem:[#allocation2 + $0xc20] sm:$0xff]
    %v566 = vld [vmem:[#allocation2 + $0xc28] sm:$0xff]
    %v567 = vld [vmem:[#allocation2 + $0xc30] sm:$0xff]
    %v568 = vld [vmem:[#allocation2 + $0xc38] sm:$0xff]
    %v569 = vld [vmem:[#allocation2 + $0xc40] sm:$0xff]
    %v570 = vld [vmem:[#allocation2 + $0xc48] sm:$0xff]
    %v571 = vld [vmem:[#allocation2 + $0xc50] sm:$0xff]
    %v572 = vld [vmem:[#allocation2 + $0xc58] sm:$0xff]
    %v573 = vld [vmem:[#allocation2 + $0xc60] sm:$0xff]
    %v574 = vld [vmem:[#allocation2 + $0xc68] sm:$0xff]
    %v575 = vld [vmem:[#allocation2 + $0xc70] sm:$0xff]
    %v576 = vld [vmem:[#allocation2 + $0xc78] sm:$0xff]
    %v577 = vld [vmem:[#allocation2 + $0xc80] sm:$0xff]
    %v578 = vld [vmem:[#allocation2 + $0xc88] sm:$0xff]
    %v579 = vld [vmem:[#allocation2 + $0xc90] sm:$0xff]
    %v580 = vld [vmem:[#allocation2 + $0xc98] sm:$0xff]
    %v581 = vld [vmem:[#allocation2 + $0xca0] sm:$0xff]
    %v582 = vld [vmem:[#allocation2 + $0xca8] sm:$0xff]
    %v583 = vld [vmem:[#allocation2 + $0xcb0] sm:$0xff]
    %v584 = vld [vmem:[#allocation2 + $0xcb8] sm:$0xff]
    %v585 = vld [vmem:[#allocation2 + $0xcc0] sm:$0xff]
    %v586 = vld [vmem:[#allocation2 + $0xcc8] sm:$0xff]
    %v587 = vld [vmem:[#allocation2 + $0xcd0] sm:$0xff]
    %v588 = vld [vmem:[#allocation2 + $0xcd8] sm:$0xff]
    %v589 = vld [vmem:[#allocation2 + $0xce0] sm:$0xff]
    %v590 = vld [vmem:[#allocation2 + $0xce8] sm:$0xff]
    %v591 = vld [vmem:[#allocation2 + $0xcf0] sm:$0xff]
    %v592 = vld [vmem:[#allocation2 + $0xcf8] sm:$0xff]
    %v593 = vld [vmem:[#allocation2 + $0xd00] sm:$0xff]
    %v594 = vld [vmem:[#allocation2 + $0xd08] sm:$0xff]
    %v595 = vld [vmem:[#allocation2 + $0xd10] sm:$0xff]
    %v596 = vld [vmem:[#allocation2 + $0xd18] sm:$0xff]
    %v597 = vld [vmem:[#allocation2 + $0xd20] sm:$0xff]
    %v598 = vld [vmem:[#allocation2 + $0xd28] sm:$0xff]
    %v599 = vld [vmem:[#allocation2 + $0xd30] sm:$0xff]
    %v600 = vld [vmem:[#allocation2 + $0xd38] sm:$0xff]
    %v601 = vld [vmem:[#allocation2 + $0xd40] sm:$0xff]
    %v602 = vld [vmem:[#allocation2 + $0xd48] sm:$0xff]
    %v603 = vld [vmem:[#allocation2 + $0xd50] sm:$0xff]
    %v604 = vld [vmem:[#allocation2 + $0xd58] sm:$0xff]
    %v605 = vld [vmem:[#allocation2 + $0xd60] sm:$0xff]
    %v606 = vld [vmem:[#allocation2 + $0xd68] sm:$0xff]
    %v607 = vld [vmem:[#allocation2 + $0xd70] sm:$0xff]
    %v608 = vld [vmem:[#allocation2 + $0xd78] sm:$0xff]
    %v609 = vld [vmem:[#allocation2 + $0xd80] sm:$0xff]
    %v610 = vld [vmem:[#allocation2 + $0xd88] sm:$0xff]
    %v611 = vld [vmem:[#allocation2 + $0xd90] sm:$0xff]
    %v612 = vld [vmem:[#allocation2 + $0xd98] sm:$0xff]
    %v613 = vld [vmem:[#allocation2 + $0xda0] sm:$0xff]
    %v614 = vld [vmem:[#allocation2 + $0xda8] sm:$0xff]
    %v615 = vld [vmem:[#allocation2 + $0xdb0] sm:$0xff]
    %v616 = vld [vmem:[#allocation2 + $0xdb8] sm:$0xff]
    %v617 = vld [vmem:[#allocation2 + $0xdc0] sm:$0xff]
    %v618 = vld [vmem:[#allocation2 + $0xdc8] sm:$0xff]
    %v619 = vld [vmem:[#allocation2 + $0xdd0] sm:$0xff]
    %v620 = vld [vmem:[#allocation2 + $0xdd8] sm:$0xff]
    %v621 = vld [vmem:[#allocation2 + $0xde0] sm:$0xff]
    %v622 = vld [vmem:[#allocation2 + $0xde8] sm:$0xff]
    %v623 = vld [vmem:[#allocation2 + $0xdf0] sm:$0xff]
    %v624 = vld [vmem:[#allocation2 + $0xdf8] sm:$0xff]
    %625 = vmatpush.msra.mxu0 %v237
    %626 = vmatpush.msra.mxu0 %v233
    %627 = vmatpush.msra.mxu0 %v229
    %628 = vmatpush.msra.mxu0 %v225
    %629 = vmatpush.msra.mxu0 %v221
    %630 = vmatpush.msra.mxu0 %v217
    %631 = vmatpush.msra.mxu0 %v213
    %632 = vmatpush.msra.mxu0 %v209
    %633 = vmatpush.msra.mxu0 %v205
    %634 = vmatpush.msra.mxu0 %v201
    %635 = vmatpush.msra.mxu0 %v197
    %636 = vmatpush.msra.mxu0 %v193
    %637 = vmatpush.msra.mxu0 %v189
    %638 = vmatpush.msra.mxu0 %v185
    %639 = vmatpush.msra.mxu0 %v181
    %640 = vmatpush.msra.mxu0 %v177
    %641 = vmatmul.f32.gmra.mxu0 %v170
    %v642 = vpop.f32.mrf.mxu0
    %v643 = vadd.f32 0.0, %v642
    %644 = vdwg.mxu0
    %645 = vmatpush.msra.mxu0 %v301
    %646 = vmatpush.msra.mxu0 %v297
    %647 = vmatpush.msra.mxu0 %v293
    %648 = vmatpush.msra.mxu0 %v289
    %649 = vmatpush.msra.mxu0 %v285
    %650 = vmatpush.msra.mxu0 %v281
    %651 = vmatpush.msra.mxu0 %v277
    %652 = vmatpush.msra.mxu0 %v273
    %653 = vmatpush.msra.mxu0 %v269
    %654 = vmatpush.msra.mxu0 %v265
    %655 = vmatpush.msra.mxu0 %v261
    %656 = vmatpush.msra.mxu0 %v257
    %657 = vmatpush.msra.mxu0 %v253
    %658 = vmatpush.msra.mxu0 %v249
    %659 = vmatpush.msra.mxu0 %v245
    %660 = vmatpush.msra.mxu0 %v241
    %661 = vmatmul.f32.gmra.mxu0 %v171
    %v662 = vpop.f32.mrf.mxu0
    %v663 = vadd.f32 %v643, %v662
    %664 = vdwg.mxu0
    %665 = vmatpush.msra.mxu0 %v365
    %666 = vmatpush.msra.mxu0 %v361
    %667 = vmatpush.msra.mxu0 %v357
    %668 = vmatpush.msra.mxu0 %v353
    %669 = vmatpush.msra.mxu0 %v349
    %670 = vmatpush.msra.mxu0 %v345
    %671 = vmatpush.msra.mxu0 %v341
    %672 = vmatpush.msra.mxu0 %v337
    %673 = vmatpush.msra.mxu0 %v333
    %674 = vmatpush.msra.mxu0 %v329
    %675 = vmatpush.msra.mxu0 %v325
    %676 = vmatpush.msra.mxu0 %v321
    %677 = vmatpush.msra.mxu0 %v317
    %678 = vmatpush.msra.mxu0 %v313
    %679 = vmatpush.msra.mxu0 %v309
    %680 = vmatpush.msra.mxu0 %v305
    %681 = vmatmul.f32.gmra.mxu0 %v172
    %v682 = vpop.f32.mrf.mxu0
    %v683 = vadd.f32 %v663, %v682
    %684 = vdwg.mxu0
    %685 = vmatpush.msra.mxu0 %v429
    %686 = vmatpush.msra.mxu0 %v425
    %687 = vmatpush.msra.mxu0 %v421
    %688 = vmatpush.msra.mxu0 %v417
    %689 = vmatpush.msra.mxu0 %v413
    %690 = vmatpush.msra.mxu0 %v409
    %691 = vmatpush.msra.mxu0 %v405
    %692 = vmatpush.msra.mxu0 %v401
    %693 = vmatpush.msra.mxu0 %v397
    %694 = vmatpush.msra.mxu0 %v393
    %695 = vmatpush.msra.mxu0 %v389
    %696 = vmatpush.msra.mxu0 %v385
    %697 = vmatpush.msra.mxu0 %v381
    %698 = vmatpush.msra.mxu0 %v377
    %699 = vmatpush.msra.mxu0 %v373
    %700 = vmatpush.msra.mxu0 %v369
    %701 = vmatmul.f32.gmra.mxu0 %v173
    %v702 = vpop.f32.mrf.mxu0
    %v703 = vadd.f32 %v683, %v702
    %704 = vdwg.mxu0
    %705 = vmatpush.msra.mxu0 %v493
    %706 = vmatpush.msra.mxu0 %v489
    %707 = vmatpush.msra.mxu0 %v485
    %708 = vmatpush.msra.mxu0 %v481
    %709 = vmatpush.msra.mxu0 %v477
    %710 = vmatpush.msra.mxu0 %v473
    %711 = vmatpush.msra.mxu0 %v469
    %712 = vmatpush.msra.mxu0 %v465
    %713 = vmatpush.msra.mxu0 %v461
    %714 = vmatpush.msra.mxu0 %v457
    %715 = vmatpush.msra.mxu0 %v453
    %716 = vmatpush.msra.mxu0 %v449
    %717 = vmatpush.msra.mxu0 %v445
    %718 = vmatpush.msra.mxu0 %v441
    %719 = vmatpush.msra.mxu0 %v437
    %720 = vmatpush.msra.mxu0 %v433
    %721 = vmatmul.f32.gmra.mxu0 %v174
    %v722 = vpop.f32.mrf.mxu0
    %v723 = vadd.f32 %v703, %v722
    %724 = vdwg.mxu0
    %725 = vmatpush.msra.mxu0 %v557
    %726 = vmatpush.msra.mxu0 %v553
    %727 = vmatpush.msra.mxu0 %v549
    %728 = vmatpush.msra.mxu0 %v545
    %729 = vmatpush.msra.mxu0 %v541
    %730 = vmatpush.msra.mxu0 %v537
    %731 = vmatpush.msra.mxu0 %v533
    %732 = vmatpush.msra.mxu0 %v529
    %733 = vmatpush.msra.mxu0 %v525
    %734 = vmatpush.msra.mxu0 %v521
    %735 = vmatpush.msra.mxu0 %v517
    %736 = vmatpush.msra.mxu0 %v513
    %737 = vmatpush.msra.mxu0 %v509
    %738 = vmatpush.msra.mxu0 %v505
    %739 = vmatpush.msra.mxu0 %v501
    %740 = vmatpush.msra.mxu0 %v497
    %741 = vmatmul.f32.gmra.mxu0 %v175
    %v742 = vpop.f32.mrf.mxu0
    %v743 = vadd.f32 %v723, %v742
    %744 = vdwg.mxu0
    %745 = vmatpush.msra.mxu0 %v621
    %746 = vmatpush.msra.mxu0 %v617
    %747 = vmatpush.msra.mxu0 %v613
    %748 = vmatpush.msra.mxu0 %v609
    %749 = vmatpush.msra.mxu0 %v605
    %750 = vmatpush.msra.mxu0 %v601
    %751 = vmatpush.msra.mxu0 %v597
    %752 = vmatpush.msra.mxu0 %v593
    %753 = vmatpush.msra.mxu0 %v589
    %754 = vmatpush.msra.mxu0 %v585
    %755 = vmatpush.msra.mxu0 %v581
    %756 = vmatpush.msra.mxu0 %v577
    %757 = vmatpush.msra.mxu0 %v573
    %758 = vmatpush.msra.mxu0 %v569
    %759 = vmatpush.msra.mxu0 %v565
    %760 = vmatpush.msra.mxu0 %v561
    %761 = vmatmul.f32.gmra.mxu0 %v176
    %v762 = vpop.f32.mrf.mxu0
    %v763 = vadd.f32 %v743, %v762
    %764 = vdwg.mxu0
    %765 = vmatpush.msra.mxu0 %v238
    %766 = vmatpush.msra.mxu0 %v234
    %767 = vmatpush.msra.mxu0 %v230
    %768 = vmatpush.msra.mxu0 %v226
    %769 = vmatpush.msra.mxu0 %v222
    %770 = vmatpush.msra.mxu0 %v218
    %771 = vmatpush.msra.mxu0 %v214
    %772 = vmatpush.msra.mxu0 %v210
    %773 = vmatpush.msra.mxu0 %v206
    %774 = vmatpush.msra.mxu0 %v202
    %775 = vmatpush.msra.mxu0 %v198
    %776 = vmatpush.msra.mxu0 %v194
    %777 = vmatpush.msra.mxu0 %v190
    %778 = vmatpush.msra.mxu0 %v186
    %779 = vmatpush.msra.mxu0 %v182
    %780 = vmatpush.msra.mxu0 %v178
    %781 = vmatmul.f32.gmra.mxu0 %v170
    %v782 = vpop.f32.mrf.mxu0
    %v783 = vadd.f32 0.0, %v782
    %784 = vdwg.mxu0
    %785 = vmatpush.msra.mxu0 %v302
    %786 = vmatpush.msra.mxu0 %v298
    %787 = vmatpush.msra.mxu0 %v294
    %788 = vmatpush.msra.mxu0 %v290
    %789 = vmatpush.msra.mxu0 %v286
    %790 = vmatpush.msra.mxu0 %v282
    %791 = vmatpush.msra.mxu0 %v278
    %792 = vmatpush.msra.mxu0 %v274
    %793 = vmatpush.msra.mxu0 %v270
    %794 = vmatpush.msra.mxu0 %v266
    %795 = vmatpush.msra.mxu0 %v262
    %796 = vmatpush.msra.mxu0 %v258
    %797 = vmatpush.msra.mxu0 %v254
    %798 = vmatpush.msra.mxu0 %v250
    %799 = vmatpush.msra.mxu0 %v246
    %800 = vmatpush.msra.mxu0 %v242
    %801 = vmatmul.f32.gmra.mxu0 %v171
    %v802 = vpop.f32.mrf.mxu0
    %v803 = vadd.f32 %v783, %v802
    %804 = vdwg.mxu0
    %805 = vmatpush.msra.mxu0 %v366
    %806 = vmatpush.msra.mxu0 %v362
    %807 = vmatpush.msra.mxu0 %v358
    %808 = vmatpush.msra.mxu0 %v354
    %809 = vmatpush.msra.mxu0 %v350
    %810 = vmatpush.msra.mxu0 %v346
    %811 = vmatpush.msra.mxu0 %v342
    %812 = vmatpush.msra.mxu0 %v338
    %813 = vmatpush.msra.mxu0 %v334
    %814 = vmatpush.msra.mxu0 %v330
    %815 = vmatpush.msra.mxu0 %v326
    %816 = vmatpush.msra.mxu0 %v322
    %817 = vmatpush.msra.mxu0 %v318
    %818 = vmatpush.msra.mxu0 %v314
    %819 = vmatpush.msra.mxu0 %v310
    %820 = vmatpush.msra.mxu0 %v306
    %821 = vmatmul.f32.gmra.mxu0 %v172
    %v822 = vpop.f32.mrf.mxu0
    %v823 = vadd.f32 %v803, %v822
    %824 = vdwg.mxu0
    %825 = vmatpush.msra.mxu0 %v430
    %826 = vmatpush.msra.mxu0 %v426
    %827 = vmatpush.msra.mxu0 %v422
    %828 = vmatpush.msra.mxu0 %v418
    %829 = vmatpush.msra.mxu0 %v414
    %830 = vmatpush.msra.mxu0 %v410
    %831 = vmatpush.msra.mxu0 %v406
    %832 = vmatpush.msra.mxu0 %v402
    %833 = vmatpush.msra.mxu0 %v398
    %834 = vmatpush.msra.mxu0 %v394
    %835 = vmatpush.msra.mxu0 %v390
    %836 = vmatpush.msra.mxu0 %v386
    %837 = vmatpush.msra.mxu0 %v382
    %838 = vmatpush.msra.mxu0 %v378
    %839 = vmatpush.msra.mxu0 %v374
    %840 = vmatpush.msra.mxu0 %v370
    %841 = vmatmul.f32.gmra.mxu0 %v173
    %v842 = vpop.f32.mrf.mxu0
    %v843 = vadd.f32 %v823, %v842
    %844 = vdwg.mxu0
    %845 = vmatpush.msra.mxu0 %v494
    %846 = vmatpush.msra.mxu0 %v490
    %847 = vmatpush.msra.mxu0 %v486
    %848 = vmatpush.msra.mxu0 %v482
    %849 = vmatpush.msra.mxu0 %v478
    %850 = vmatpush.msra.mxu0 %v474
    %851 = vmatpush.msra.mxu0 %v470
    %852 = vmatpush.msra.mxu0 %v466
    %853 = vmatpush.msra.mxu0 %v462
    %854 = vmatpush.msra.mxu0 %v458
    %855 = vmatpush.msra.mxu0 %v454
    %856 = vmatpush.msra.mxu0 %v450
    %857 = vmatpush.msra.mxu0 %v446
    %858 = vmatpush.msra.mxu0 %v442
    %859 = vmatpush.msra.mxu0 %v438
    %860 = vmatpush.msra.mxu0 %v434
    %861 = vmatmul.f32.gmra.mxu0 %v174
    %v862 = vpop.f32.mrf.mxu0
    %v863 = vadd.f32 %v843, %v862
    %864 = vdwg.mxu0
    %865 = vmatpush.msra.mxu0 %v558
    %866 = vmatpush.msra.mxu0 %v554
    %867 = vmatpush.msra.mxu0 %v550
    %868 = vmatpush.msra.mxu0 %v546
    %869 = vmatpush.msra.mxu0 %v542
    %870 = vmatpush.msra.mxu0 %v538
    %871 = vmatpush.msra.mxu0 %v534
    %872 = vmatpush.msra.mxu0 %v530
    %873 = vmatpush.msra.mxu0 %v526
    %874 = vmatpush.msra.mxu0 %v522
    %875 = vmatpush.msra.mxu0 %v518
    %876 = vmatpush.msra.mxu0 %v514
    %877 = vmatpush.msra.mxu0 %v510
    %878 = vmatpush.msra.mxu0 %v506
    %879 = vmatpush.msra.mxu0 %v502
    %880 = vmatpush.msra.mxu0 %v498
    %881 = vmatmul.f32.gmra.mxu0 %v175
    %v882 = vpop.f32.mrf.mxu0
    %v883 = vadd.f32 %v863, %v882
    %884 = vdwg.mxu0
    %885 = vmatpush.msra.mxu0 %v622
    %886 = vmatpush.msra.mxu0 %v618
    %887 = vmatpush.msra.mxu0 %v614
    %888 = vmatpush.msra.mxu0 %v610
    %889 = vmatpush.msra.mxu0 %v606
    %890 = vmatpush.msra.mxu0 %v602
    %891 = vmatpush.msra.mxu0 %v598
    %892 = vmatpush.msra.mxu0 %v594
    %893 = vmatpush.msra.mxu0 %v590
    %894 = vmatpush.msra.mxu0 %v586
    %895 = vmatpush.msra.mxu0 %v582
    %896 = vmatpush.msra.mxu0 %v578
    %897 = vmatpush.msra.mxu0 %v574
    %898 = vmatpush.msra.mxu0 %v570
    %899 = vmatpush.msra.mxu0 %v566
    %900 = vmatpush.msra.mxu0 %v562
    %901 = vmatmul.f32.gmra.mxu0 %v176
    %v902 = vpop.f32.mrf.mxu0
    %v903 = vadd.f32 %v883, %v902
    %904 = vdwg.mxu0
    %905 = vmatpush.msra.mxu0 %v239
    %906 = vmatpush.msra.mxu0 %v235
    %907 = vmatpush.msra.mxu0 %v231
    %908 = vmatpush.msra.mxu0 %v227
    %909 = vmatpush.msra.mxu0 %v223
    %910 = vmatpush.msra.mxu0 %v219
    %911 = vmatpush.msra.mxu0 %v215
    %912 = vmatpush.msra.mxu0 %v211
    %913 = vmatpush.msra.mxu0 %v207
    %914 = vmatpush.msra.mxu0 %v203
    %915 = vmatpush.msra.mxu0 %v199
    %916 = vmatpush.msra.mxu0 %v195
    %917 = vmatpush.msra.mxu0 %v191
    %918 = vmatpush.msra.mxu0 %v187
    %919 = vmatpush.msra.mxu0 %v183
    %920 = vmatpush.msra.mxu0 %v179
    %921 = vmatmul.f32.gmra.mxu0 %v170
    %v922 = vpop.f32.mrf.mxu0
    %v923 = vadd.f32 0.0, %v922
    %924 = vdwg.mxu0
    %925 = vmatpush.msra.mxu0 %v303
    %926 = vmatpush.msra.mxu0 %v299
    %927 = vmatpush.msra.mxu0 %v295
    %928 = vmatpush.msra.mxu0 %v291
    %929 = vmatpush.msra.mxu0 %v287
    %930 = vmatpush.msra.mxu0 %v283
    %931 = vmatpush.msra.mxu0 %v279
    %932 = vmatpush.msra.mxu0 %v275
    %933 = vmatpush.msra.mxu0 %v271
    %934 = vmatpush.msra.mxu0 %v267
    %935 = vmatpush.msra.mxu0 %v263
    %936 = vmatpush.msra.mxu0 %v259
    %937 = vmatpush.msra.mxu0 %v255
    %938 = vmatpush.msra.mxu0 %v251
    %939 = vmatpush.msra.mxu0 %v247
    %940 = vmatpush.msra.mxu0 %v243
    %941 = vmatmul.f32.gmra.mxu0 %v171
    %v942 = vpop.f32.mrf.mxu0
    %v943 = vadd.f32 %v923, %v942
    %944 = vdwg.mxu0
    %945 = vmatpush.msra.mxu0 %v367
    %946 = vmatpush.msra.mxu0 %v363
    %947 = vmatpush.msra.mxu0 %v359
    %948 = vmatpush.msra.mxu0 %v355
    %949 = vmatpush.msra.mxu0 %v351
    %950 = vmatpush.msra.mxu0 %v347
    %951 = vmatpush.msra.mxu0 %v343
    %952 = vmatpush.msra.mxu0 %v339
    %953 = vmatpush.msra.mxu0 %v335
    %954 = vmatpush.msra.mxu0 %v331
    %955 = vmatpush.msra.mxu0 %v327
    %956 = vmatpush.msra.mxu0 %v323
    %957 = vmatpush.msra.mxu0 %v319
    %958 = vmatpush.msra.mxu0 %v315
    %959 = vmatpush.msra.mxu0 %v311
    %960 = vmatpush.msra.mxu0 %v307
    %961 = vmatmul.f32.gmra.mxu0 %v172
    %v962 = vpop.f32.mrf.mxu0
    %v963 = vadd.f32 %v943, %v962
    %964 = vdwg.mxu0
    %965 = vmatpush.msra.mxu0 %v431
    %966 = vmatpush.msra.mxu0 %v427
    %967 = vmatpush.msra.mxu0 %v423
    %968 = vmatpush.msra.mxu0 %v419
    %969 = vmatpush.msra.mxu0 %v415
    %970 = vmatpush.msra.mxu0 %v411
    %971 = vmatpush.msra.mxu0 %v407
    %972 = vmatpush.msra.mxu0 %v403
    %973 = vmatpush.msra.mxu0 %v399
    %974 = vmatpush.msra.mxu0 %v395
    %975 = vmatpush.msra.mxu0 %v391
    %976 = vmatpush.msra.mxu0 %v387
    %977 = vmatpush.msra.mxu0 %v383
    %978 = vmatpush.msra.mxu0 %v379
    %979 = vmatpush.msra.mxu0 %v375
    %980 = vmatpush.msra.mxu0 %v371
    %981 = vmatmul.f32.gmra.mxu0 %v173
    %v982 = vpop.f32.mrf.mxu0
    %v983 = vadd.f32 %v963, %v982
    %984 = vdwg.mxu0
    %985 = vmatpush.msra.mxu0 %v495
    %986 = vmatpush.msra.mxu0 %v491
    %987 = vmatpush.msra.mxu0 %v487
    %988 = vmatpush.msra.mxu0 %v483
    %989 = vmatpush.msra.mxu0 %v479
    %990 = vmatpush.msra.mxu0 %v475
    %991 = vmatpush.msra.mxu0 %v471
    %992 = vmatpush.msra.mxu0 %v467
    %993 = vmatpush.msra.mxu0 %v463
    %994 = vmatpush.msra.mxu0 %v459
    %995 = vmatpush.msra.mxu0 %v455
    %996 = vmatpush.msra.mxu0 %v451
    %997 = vmatpush.msra.mxu0 %v447
    %998 = vmatpush.msra.mxu0 %v443
    %999 = vmatpush.msra.mxu0 %v439
    %1000 = vmatpush.msra.mxu0 %v435
    %1001 = vmatmul.f32.gmra.mxu0 %v174
    %v1002 = vpop.f32.mrf.mxu0
    %v1003 = vadd.f32 %v983, %v1002
    %1004 = vdwg.mxu0
    %1005 = vmatpush.msra.mxu0 %v559
    %1006 = vmatpush.msra.mxu0 %v555
    %1007 = vmatpush.msra.mxu0 %v551
    %1008 = vmatpush.msra.mxu0 %v547
    %1009 = vmatpush.msra.mxu0 %v543
    %1010 = vmatpush.msra.mxu0 %v539
    %1011 = vmatpush.msra.mxu0 %v535
    %1012 = vmatpush.msra.mxu0 %v531
    %1013 = vmatpush.msra.mxu0 %v527
    %1014 = vmatpush.msra.mxu0 %v523
    %1015 = vmatpush.msra.mxu0 %v519
    %1016 = vmatpush.msra.mxu0 %v515
    %1017 = vmatpush.msra.mxu0 %v511
    %1018 = vmatpush.msra.mxu0 %v507
    %1019 = vmatpush.msra.mxu0 %v503
    %1020 = vmatpush.msra.mxu0 %v499
    %1021 = vmatmul.f32.gmra.mxu0 %v175
    %v1022 = vpop.f32.mrf.mxu0
    %v1023 = vadd.f32 %v1003, %v1022
    %1024 = vdwg.mxu0
    %1025 = vmatpush.msra.mxu0 %v623
    %1026 = vmatpush.msra.mxu0 %v619
    %1027 = vmatpush.msra.mxu0 %v615
    %1028 = vmatpush.msra.mxu0 %v611
    %1029 = vmatpush.msra.mxu0 %v607
    %1030 = vmatpush.msra.mxu0 %v603
    %1031 = vmatpush.msra.mxu0 %v599
    %1032 = vmatpush.msra.mxu0 %v595
    %1033 = vmatpush.msra.mxu0 %v591
    %1034 = vmatpush.msra.mxu0 %v587
    %1035 = vmatpush.msra.mxu0 %v583
    %1036 = vmatpush.msra.mxu0 %v579
    %1037 = vmatpush.msra.mxu0 %v575
    %1038 = vmatpush.msra.mxu0 %v571
    %1039 = vmatpush.msra.mxu0 %v567
    %1040 = vmatpush.msra.mxu0 %v563
    %1041 = vmatmul.f32.gmra.mxu0 %v176
    %v1042 = vpop.f32.mrf.mxu0
    %v1043 = vadd.f32 %v1023, %v1042
    %1044 = vdwg.mxu0
    %1045 = vmatpush.msra.mxu0 %v240
    %1046 = vmatpush.msra.mxu0 %v236
    %1047 = vmatpush.msra.mxu0 %v232
    %1048 = vmatpush.msra.mxu0 %v228
    %1049 = vmatpush.msra.mxu0 %v224
    %1050 = vmatpush.msra.mxu0 %v220
    %1051 = vmatpush.msra.mxu0 %v216
    %1052 = vmatpush.msra.mxu0 %v212
    %1053 = vmatpush.msra.mxu0 %v208
    %1054 = vmatpush.msra.mxu0 %v204
    %1055 = vmatpush.msra.mxu0 %v200
    %1056 = vmatpush.msra.mxu0 %v196
    %1057 = vmatpush.msra.mxu0 %v192
    %1058 = vmatpush.msra.mxu0 %v188
    %1059 = vmatpush.msra.mxu0 %v184
    %1060 = vmatpush.msra.mxu0 %v180
    %1061 = vmatmul.f32.gmra.mxu0 %v170
    %v1062 = vpop.f32.mrf.mxu0
    %v1063 = vadd.f32 0.0, %v1062
    %1064 = vdwg.mxu0
    %1065 = vmatpush.msra.mxu0 %v304
    %1066 = vmatpush.msra.mxu0 %v300
    %1067 = vmatpush.msra.mxu0 %v296
    %1068 = vmatpush.msra.mxu0 %v292
    %1069 = vmatpush.msra.mxu0 %v288
    %1070 = vmatpush.msra.mxu0 %v284
    %1071 = vmatpush.msra.mxu0 %v280
    %1072 = vmatpush.msra.mxu0 %v276
    %1073 = vmatpush.msra.mxu0 %v272
    %1074 = vmatpush.msra.mxu0 %v268
    %1075 = vmatpush.msra.mxu0 %v264
    %1076 = vmatpush.msra.mxu0 %v260
    %1077 = vmatpush.msra.mxu0 %v256
    %1078 = vmatpush.msra.mxu0 %v252
    %1079 = vmatpush.msra.mxu0 %v248
    %1080 = vmatpush.msra.mxu0 %v244
    %1081 = vmatmul.f32.gmra.mxu0 %v171
    %v1082 = vpop.f32.mrf.mxu0
    %v1083 = vadd.f32 %v1063, %v1082
    %1084 = vdwg.mxu0
    %1085 = vmatpush.msra.mxu0 %v368
    %1086 = vmatpush.msra.mxu0 %v364
    %1087 = vmatpush.msra.mxu0 %v360
    %1088 = vmatpush.msra.mxu0 %v356
    %1089 = vmatpush.msra.mxu0 %v352
    %1090 = vmatpush.msra.mxu0 %v348
    %1091 = vmatpush.msra.mxu0 %v344
    %1092 = vmatpush.msra.mxu0 %v340
    %1093 = vmatpush.msra.mxu0 %v336
    %1094 = vmatpush.msra.mxu0 %v332
    %1095 = vmatpush.msra.mxu0 %v328
    %1096 = vmatpush.msra.mxu0 %v324
    %1097 = vmatpush.msra.mxu0 %v320
    %1098 = vmatpush.msra.mxu0 %v316
    %1099 = vmatpush.msra.mxu0 %v312
    %1100 = vmatpush.msra.mxu0 %v308
    %1101 = vmatmul.f32.gmra.mxu0 %v172
    %v1102 = vpop.f32.mrf.mxu0
    %v1103 = vadd.f32 %v1083, %v1102
    %1104 = vdwg.mxu0
    %1105 = vmatpush.msra.mxu0 %v432
    %1106 = vmatpush.msra.mxu0 %v428
    %1107 = vmatpush.msra.mxu0 %v424
    %1108 = vmatpush.msra.mxu0 %v420
    %1109 = vmatpush.msra.mxu0 %v416
    %1110 = vmatpush.msra.mxu0 %v412
    %1111 = vmatpush.msra.mxu0 %v408
    %1112 = vmatpush.msra.mxu0 %v404
    %1113 = vmatpush.msra.mxu0 %v400
    %1114 = vmatpush.msra.mxu0 %v396
    %1115 = vmatpush.msra.mxu0 %v392
    %1116 = vmatpush.msra.mxu0 %v388
    %1117 = vmatpush.msra.mxu0 %v384
    %1118 = vmatpush.msra.mxu0 %v380
    %1119 = vmatpush.msra.mxu0 %v376
    %1120 = vmatpush.msra.mxu0 %v372
    %1121 = vmatmul.f32.gmra.mxu0 %v173
    %v1122 = vpop.f32.mrf.mxu0
    %v1123 = vadd.f32 %v1103, %v1122
    %1124 = vdwg.mxu0
    %1125 = vmatpush.msra.mxu0 %v496
    %1126 = vmatpush.msra.mxu0 %v492
    %1127 = vmatpush.msra.mxu0 %v488
    %1128 = vmatpush.msra.mxu0 %v484
    %1129 = vmatpush.msra.mxu0 %v480
    %1130 = vmatpush.msra.mxu0 %v476
    %1131 = vmatpush.msra.mxu0 %v472
    %1132 = vmatpush.msra.mxu0 %v468
    %1133 = vmatpush.msra.mxu0 %v464
    %1134 = vmatpush.msra.mxu0 %v460
    %1135 = vmatpush.msra.mxu0 %v456
    %1136 = vmatpush.msra.mxu0 %v452
    %1137 = vmatpush.msra.mxu0 %v448
    %1138 = vmatpush.msra.mxu0 %v444
    %1139 = vmatpush.msra.mxu0 %v440
    %1140 = vmatpush.msra.mxu0 %v436
    %1141 = vmatmul.f32.gmra.mxu0 %v174
    %v1142 = vpop.f32.mrf.mxu0
    %v1143 = vadd.f32 %v1123, %v1142
    %1144 = vdwg.mxu0
    %1145 = vmatpush.msra.mxu0 %v560
    %1146 = vmatpush.msra.mxu0 %v556
    %1147 = vmatpush.msra.mxu0 %v552
    %1148 = vmatpush.msra.mxu0 %v548
    %1149 = vmatpush.msra.mxu0 %v544
    %1150 = vmatpush.msra.mxu0 %v540
    %1151 = vmatpush.msra.mxu0 %v536
    %1152 = vmatpush.msra.mxu0 %v532
    %1153 = vmatpush.msra.mxu0 %v528
    %1154 = vmatpush.msra.mxu0 %v524
    %1155 = vmatpush.msra.mxu0 %v520
    %1156 = vmatpush.msra.mxu0 %v516
    %1157 = vmatpush.msra.mxu0 %v512
    %1158 = vmatpush.msra.mxu0 %v508
    %1159 = vmatpush.msra.mxu0 %v504
    %1160 = vmatpush.msra.mxu0 %v500
    %1161 = vmatmul.f32.gmra.mxu0 %v175
    %v1162 = vpop.f32.mrf.mxu0
    %v1163 = vadd.f32 %v1143, %v1162
    %1164 = vdwg.mxu0
    %1165 = vmatpush.msra.mxu0 %v624
    %1166 = vmatpush.msra.mxu0 %v620
    %1167 = vmatpush.msra.mxu0 %v616
    %1168 = vmatpush.msra.mxu0 %v612
    %1169 = vmatpush.msra.mxu0 %v608
    %1170 = vmatpush.msra.mxu0 %v604
    %1171 = vmatpush.msra.mxu0 %v600
    %1172 = vmatpush.msra.mxu0 %v596
    %1173 = vmatpush.msra.mxu0 %v592
    %1174 = vmatpush.msra.mxu0 %v588
    %1175 = vmatpush.msra.mxu0 %v584
    %1176 = vmatpush.msra.mxu0 %v580
    %1177 = vmatpush.msra.mxu0 %v576
    %1178 = vmatpush.msra.mxu0 %v572
    %1179 = vmatpush.msra.mxu0 %v568
    %1180 = vmatpush.msra.mxu0 %v564
    %1181 = vmatmul.f32.gmra.mxu0 %v176
    %v1182 = vpop.f32.mrf.mxu0
    %v1183 = vadd.f32 %v1163, %v1182
    %1184 = vdwg.mxu0
    %v1185 = vld [vmem:[#allocation5] sm:$0xff]
    %v1186 = vld [vmem:[#allocation5 + $0x8] sm:$0xff]
    %v1187 = vld [vmem:[#allocation5 + $0x10] sm:$0xff]
    %v1188 = vld [vmem:[#allocation5 + $0x18] sm:$0xff]
    %v1189 = vld [vmem:[#allocation5 + $0x20] sm:$0xff]
    %v1190 = vld [vmem:[#allocation5 + $0x28] sm:$0xff]
    %v1191 = vld [vmem:[#allocation5 + $0x30] sm:$0xff]
    %v1192 = vld [vmem:[#allocation5 + $0x38] sm:$0xff]
    %v1193 = vld [vmem:[#allocation5 + $0x40] sm:$0xff]
    %v1194 = vld [vmem:[#allocation5 + $0x48] sm:$0xff]
    %v1195 = vld [vmem:[#allocation5 + $0x50] sm:$0xff]
    %v1196 = vld [vmem:[#allocation5 + $0x58] sm:$0xff]
    %v1197 = vld [vmem:[#allocation5 + $0x60] sm:$0xff]
    %v1198 = vld [vmem:[#allocation5 + $0x68] sm:$0xff]
    %v1199 = vld [vmem:[#allocation5 + $0x70] sm:$0xff]
    %v1200 = vld [vmem:[#allocation5 + $0x78] sm:$0xff]
    %v1201 = vld [vmem:[#allocation5 + $0x80] sm:$0xff]
    %v1202 = vld [vmem:[#allocation5 + $0x88] sm:$0xff]
    %v1203 = vld [vmem:[#allocation5 + $0x90] sm:$0xff]
    %v1204 = vld [vmem:[#allocation5 + $0x98] sm:$0xff]
    %v1205 = vld [vmem:[#allocation5 + $0xa0] sm:$0xff]
    %v1206 = vld [vmem:[#allocation5 + $0xa8] sm:$0xff]
    %v1207 = vld [vmem:[#allocation5 + $0xb0] sm:$0xff]
    %v1208 = vld [vmem:[#allocation5 + $0xb8] sm:$0xff]
    %v1209 = vld [vmem:[#allocation5 + $0xc0] sm:$0xff]
    %v1210 = vld [vmem:[#allocation5 + $0xc8] sm:$0xff]
    %v1211 = vld [vmem:[#allocation5 + $0xd0] sm:$0xff]
    %v1212 = vld [vmem:[#allocation5 + $0xd8] sm:$0xff]
    %v1213 = vld [vmem:[#allocation5 + $0xe0] sm:$0xff]
    %v1214 = vld [vmem:[#allocation5 + $0xe8] sm:$0xff]
    %v1215 = vld [vmem:[#allocation5 + $0xf0] sm:$0xff]
    %v1216 = vld [vmem:[#allocation5 + $0xf8] sm:$0xff]
    %v1217 = vld [vmem:[#allocation5 + $0x100] sm:$0xff]
    %v1218 = vld [vmem:[#allocation5 + $0x108] sm:$0xff]
    %v1219 = vld [vmem:[#allocation5 + $0x110] sm:$0xff]
    %v1220 = vld [vmem:[#allocation5 + $0x118] sm:$0xff]
    %v1221 = vld [vmem:[#allocation5 + $0x120] sm:$0xff]
    %v1222 = vld [vmem:[#allocation5 + $0x128] sm:$0xff]
    %v1223 = vld [vmem:[#allocation5 + $0x130] sm:$0xff]
    %v1224 = vld [vmem:[#allocation5 + $0x138] sm:$0xff]
    %v1225 = vld [vmem:[#allocation5 + $0x140] sm:$0xff]
    %v1226 = vld [vmem:[#allocation5 + $0x148] sm:$0xff]
    %v1227 = vld [vmem:[#allocation5 + $0x150] sm:$0xff]
    %v1228 = vld [vmem:[#allocation5 + $0x158] sm:$0xff]
    %v1229 = vld [vmem:[#allocation5 + $0x160] sm:$0xff]
    %v1230 = vld [vmem:[#allocation5 + $0x168] sm:$0xff]
    %v1231 = vld [vmem:[#allocation5 + $0x170] sm:$0xff]
    %v1232 = vld [vmem:[#allocation5 + $0x178] sm:$0xff]
    %v1233 = vld [vmem:[#allocation5 + $0x180] sm:$0xff]
    %v1234 = vld [vmem:[#allocation5 + $0x188] sm:$0xff]
    %v1235 = vld [vmem:[#allocation5 + $0x190] sm:$0xff]
    %v1236 = vld [vmem:[#allocation5 + $0x198] sm:$0xff]
    %v1237 = vld [vmem:[#allocation5 + $0x1a0] sm:$0xff]
    %v1238 = vld [vmem:[#allocation5 + $0x1a8] sm:$0xff]
    %v1239 = vld [vmem:[#allocation5 + $0x1b0] sm:$0xff]
    %v1240 = vld [vmem:[#allocation5 + $0x1b8] sm:$0xff]
    %v1241 = vld [vmem:[#allocation5 + $0x1c0] sm:$0xff]
    %v1242 = vld [vmem:[#allocation5 + $0x1c8] sm:$0xff]
    %v1243 = vld [vmem:[#allocation5 + $0x1d0] sm:$0xff]
    %v1244 = vld [vmem:[#allocation5 + $0x1d8] sm:$0xff]
    %v1245 = vld [vmem:[#allocation5 + $0x1e0] sm:$0xff]
    %v1246 = vld [vmem:[#allocation5 + $0x1e8] sm:$0xff]
    %v1247 = vld [vmem:[#allocation5 + $0x1f0] sm:$0xff]
    %v1248 = vld [vmem:[#allocation5 + $0x1f8] sm:$0xff]
    %v1249 = vld [vmem:[#allocation5 + $0x200] sm:$0xff]
    %v1250 = vld [vmem:[#allocation5 + $0x208] sm:$0xff]
    %v1251 = vld [vmem:[#allocation5 + $0x210] sm:$0xff]
    %v1252 = vld [vmem:[#allocation5 + $0x218] sm:$0xff]
    %v1253 = vld [vmem:[#allocation5 + $0x220] sm:$0xff]
    %v1254 = vld [vmem:[#allocation5 + $0x228] sm:$0xff]
    %v1255 = vld [vmem:[#allocation5 + $0x230] sm:$0xff]
    %v1256 = vld [vmem:[#allocation5 + $0x238] sm:$0xff]
    %v1257 = vld [vmem:[#allocation5 + $0x240] sm:$0xff]
    %v1258 = vld [vmem:[#allocation5 + $0x248] sm:$0xff]
    %v1259 = vld [vmem:[#allocation5 + $0x250] sm:$0xff]
    %v1260 = vld [vmem:[#allocation5 + $0x258] sm:$0xff]
    %v1261 = vld [vmem:[#allocation5 + $0x260] sm:$0xff]
    %v1262 = vld [vmem:[#allocation5 + $0x268] sm:$0xff]
    %v1263 = vld [vmem:[#allocation5 + $0x270] sm:$0xff]
    %v1264 = vld [vmem:[#allocation5 + $0x278] sm:$0xff]
    %v1265 = vld [vmem:[#allocation5 + $0x280] sm:$0xff]
    %v1266 = vld [vmem:[#allocation5 + $0x288] sm:$0xff]
    %v1267 = vld [vmem:[#allocation5 + $0x290] sm:$0xff]
    %v1268 = vld [vmem:[#allocation5 + $0x298] sm:$0xff]
    %v1269 = vld [vmem:[#allocation5 + $0x2a0] sm:$0xff]
    %v1270 = vld [vmem:[#allocation5 + $0x2a8] sm:$0xff]
    %v1271 = vld [vmem:[#allocation5 + $0x2b0] sm:$0xff]
    %v1272 = vld [vmem:[#allocation5 + $0x2b8] sm:$0xff]
    %v1273 = vld [vmem:[#allocation5 + $0x2c0] sm:$0xff]
    %v1274 = vld [vmem:[#allocation5 + $0x2c8] sm:$0xff]
    %v1275 = vld [vmem:[#allocation5 + $0x2d0] sm:$0xff]
    %v1276 = vld [vmem:[#allocation5 + $0x2d8] sm:$0xff]
    %v1277 = vld [vmem:[#allocation5 + $0x2e0] sm:$0xff]
    %v1278 = vld [vmem:[#allocation5 + $0x2e8] sm:$0xff]
    %v1279 = vld [vmem:[#allocation5 + $0x2f0] sm:$0xff]
    %v1280 = vld [vmem:[#allocation5 + $0x2f8] sm:$0xff]
    %v1281 = vld [vmem:[#allocation5 + $0x300] sm:$0xff]
    %v1282 = vld [vmem:[#allocation5 + $0x308] sm:$0xff]
    %v1283 = vld [vmem:[#allocation5 + $0x310] sm:$0xff]
    %v1284 = vld [vmem:[#allocation5 + $0x318] sm:$0xff]
    %v1285 = vld [vmem:[#allocation5 + $0x320] sm:$0xff]
    %v1286 = vld [vmem:[#allocation5 + $0x328] sm:$0xff]
    %v1287 = vld [vmem:[#allocation5 + $0x330] sm:$0xff]
    %v1288 = vld [vmem:[#allocation5 + $0x338] sm:$0xff]
    %v1289 = vld [vmem:[#allocation5 + $0x340] sm:$0xff]
    %v1290 = vld [vmem:[#allocation5 + $0x348] sm:$0xff]
    %v1291 = vld [vmem:[#allocation5 + $0x350] sm:$0xff]
    %v1292 = vld [vmem:[#allocation5 + $0x358] sm:$0xff]
    %v1293 = vld [vmem:[#allocation5 + $0x360] sm:$0xff]
    %v1294 = vld [vmem:[#allocation5 + $0x368] sm:$0xff]
    %v1295 = vld [vmem:[#allocation5 + $0x370] sm:$0xff]
    %v1296 = vld [vmem:[#allocation5 + $0x378] sm:$0xff]
    %v1297 = vld [vmem:[#allocation5 + $0x380] sm:$0xff]
    %v1298 = vld [vmem:[#allocation5 + $0x388] sm:$0xff]
    %v1299 = vld [vmem:[#allocation5 + $0x390] sm:$0xff]
    %v1300 = vld [vmem:[#allocation5 + $0x398] sm:$0xff]
    %v1301 = vld [vmem:[#allocation5 + $0x3a0] sm:$0xff]
    %v1302 = vld [vmem:[#allocation5 + $0x3a8] sm:$0xff]
    %v1303 = vld [vmem:[#allocation5 + $0x3b0] sm:$0xff]
    %v1304 = vld [vmem:[#allocation5 + $0x3b8] sm:$0xff]
    %v1305 = vld [vmem:[#allocation5 + $0x3c0] sm:$0xff]
    %v1306 = vld [vmem:[#allocation5 + $0x3c8] sm:$0xff]
    %v1307 = vld [vmem:[#allocation5 + $0x3d0] sm:$0xff]
    %v1308 = vld [vmem:[#allocation5 + $0x3d8] sm:$0xff]
    %v1309 = vld [vmem:[#allocation5 + $0x3e0] sm:$0xff]
    %v1310 = vld [vmem:[#allocation5 + $0x3e8] sm:$0xff]
    %v1311 = vld [vmem:[#allocation5 + $0x3f0] sm:$0xff]
    %v1312 = vld [vmem:[#allocation5 + $0x3f8] sm:$0xff]
    %v1313 = vld [vmem:[#allocation5 + $0x400] sm:$0xff]
    %v1314 = vld [vmem:[#allocation5 + $0x408] sm:$0xff]
    %v1315 = vld [vmem:[#allocation5 + $0x410] sm:$0xff]
    %v1316 = vld [vmem:[#allocation5 + $0x418] sm:$0xff]
    %v1317 = vld [vmem:[#allocation5 + $0x420] sm:$0xff]
    %v1318 = vld [vmem:[#allocation5 + $0x428] sm:$0xff]
    %v1319 = vld [vmem:[#allocation5 + $0x430] sm:$0xff]
    %v1320 = vld [vmem:[#allocation5 + $0x438] sm:$0xff]
    %v1321 = vld [vmem:[#allocation5 + $0x440] sm:$0xff]
    %v1322 = vld [vmem:[#allocation5 + $0x448] sm:$0xff]
    %v1323 = vld [vmem:[#allocation5 + $0x450] sm:$0xff]
    %v1324 = vld [vmem:[#allocation5 + $0x458] sm:$0xff]
    %v1325 = vld [vmem:[#allocation5 + $0x460] sm:$0xff]
    %v1326 = vld [vmem:[#allocation5 + $0x468] sm:$0xff]
    %v1327 = vld [vmem:[#allocation5 + $0x470] sm:$0xff]
    %v1328 = vld [vmem:[#allocation5 + $0x478] sm:$0xff]
    %v1329 = vld [vmem:[#allocation5 + $0x480] sm:$0xff]
    %v1330 = vld [vmem:[#allocation5 + $0x488] sm:$0xff]
    %v1331 = vld [vmem:[#allocation5 + $0x490] sm:$0xff]
    %v1332 = vld [vmem:[#allocation5 + $0x498] sm:$0xff]
    %v1333 = vld [vmem:[#allocation5 + $0x4a0] sm:$0xff]
    %v1334 = vld [vmem:[#allocation5 + $0x4a8] sm:$0xff]
    %v1335 = vld [vmem:[#allocation5 + $0x4b0] sm:$0xff]
    %v1336 = vld [vmem:[#allocation5 + $0x4b8] sm:$0xff]
    %v1337 = vld [vmem:[#allocation5 + $0x4c0] sm:$0xff]
    %v1338 = vld [vmem:[#allocation5 + $0x4c8] sm:$0xff]
    %v1339 = vld [vmem:[#allocation5 + $0x4d0] sm:$0xff]
    %v1340 = vld [vmem:[#allocation5 + $0x4d8] sm:$0xff]
    %v1341 = vld [vmem:[#allocation5 + $0x4e0] sm:$0xff]
    %v1342 = vld [vmem:[#allocation5 + $0x4e8] sm:$0xff]
    %v1343 = vld [vmem:[#allocation5 + $0x4f0] sm:$0xff]
    %v1344 = vld [vmem:[#allocation5 + $0x4f8] sm:$0xff]
    %v1345 = vld [vmem:[#allocation5 + $0x500] sm:$0xff]
    %v1346 = vld [vmem:[#allocation5 + $0x508] sm:$0xff]
    %v1347 = vld [vmem:[#allocation5 + $0x510] sm:$0xff]
    %v1348 = vld [vmem:[#allocation5 + $0x518] sm:$0xff]
    %v1349 = vld [vmem:[#allocation5 + $0x520] sm:$0xff]
    %v1350 = vld [vmem:[#allocation5 + $0x528] sm:$0xff]
    %v1351 = vld [vmem:[#allocation5 + $0x530] sm:$0xff]
    %v1352 = vld [vmem:[#allocation5 + $0x538] sm:$0xff]
    %v1353 = vld [vmem:[#allocation5 + $0x540] sm:$0xff]
    %v1354 = vld [vmem:[#allocation5 + $0x548] sm:$0xff]
    %v1355 = vld [vmem:[#allocation5 + $0x550] sm:$0xff]
    %v1356 = vld [vmem:[#allocation5 + $0x558] sm:$0xff]
    %v1357 = vld [vmem:[#allocation5 + $0x560] sm:$0xff]
    %v1358 = vld [vmem:[#allocation5 + $0x568] sm:$0xff]
    %v1359 = vld [vmem:[#allocation5 + $0x570] sm:$0xff]
    %v1360 = vld [vmem:[#allocation5 + $0x578] sm:$0xff]
    %v1361 = vld [vmem:[#allocation5 + $0x580] sm:$0xff]
    %v1362 = vld [vmem:[#allocation5 + $0x588] sm:$0xff]
    %v1363 = vld [vmem:[#allocation5 + $0x590] sm:$0xff]
    %v1364 = vld [vmem:[#allocation5 + $0x598] sm:$0xff]
    %v1365 = vld [vmem:[#allocation5 + $0x5a0] sm:$0xff]
    %v1366 = vld [vmem:[#allocation5 + $0x5a8] sm:$0xff]
    %v1367 = vld [vmem:[#allocation5 + $0x5b0] sm:$0xff]
    %v1368 = vld [vmem:[#allocation5 + $0x5b8] sm:$0xff]
    %v1369 = vld [vmem:[#allocation5 + $0x5c0] sm:$0xff]
    %v1370 = vld [vmem:[#allocation5 + $0x5c8] sm:$0xff]
    %v1371 = vld [vmem:[#allocation5 + $0x5d0] sm:$0xff]
    %v1372 = vld [vmem:[#allocation5 + $0x5d8] sm:$0xff]
    %v1373 = vld [vmem:[#allocation5 + $0x5e0] sm:$0xff]
    %v1374 = vld [vmem:[#allocation5 + $0x5e8] sm:$0xff]
    %v1375 = vld [vmem:[#allocation5 + $0x5f0] sm:$0xff]
    %v1376 = vld [vmem:[#allocation5 + $0x5f8] sm:$0xff]
    %v1377 = vld [vmem:[#allocation5 + $0x600] sm:$0xff]
    %v1378 = vld [vmem:[#allocation5 + $0x608] sm:$0xff]
    %v1379 = vld [vmem:[#allocation5 + $0x610] sm:$0xff]
    %v1380 = vld [vmem:[#allocation5 + $0x618] sm:$0xff]
    %v1381 = vld [vmem:[#allocation5 + $0x620] sm:$0xff]
    %v1382 = vld [vmem:[#allocation5 + $0x628] sm:$0xff]
    %v1383 = vld [vmem:[#allocation5 + $0x630] sm:$0xff]
    %v1384 = vld [vmem:[#allocation5 + $0x638] sm:$0xff]
    %v1385 = vld [vmem:[#allocation5 + $0x640] sm:$0xff]
    %v1386 = vld [vmem:[#allocation5 + $0x648] sm:$0xff]
    %v1387 = vld [vmem:[#allocation5 + $0x650] sm:$0xff]
    %v1388 = vld [vmem:[#allocation5 + $0x658] sm:$0xff]
    %v1389 = vld [vmem:[#allocation5 + $0x660] sm:$0xff]
    %v1390 = vld [vmem:[#allocation5 + $0x668] sm:$0xff]
    %v1391 = vld [vmem:[#allocation5 + $0x670] sm:$0xff]
    %v1392 = vld [vmem:[#allocation5 + $0x678] sm:$0xff]
    %v1393 = vld [vmem:[#allocation5 + $0x680] sm:$0xff]
    %v1394 = vld [vmem:[#allocation5 + $0x688] sm:$0xff]
    %v1395 = vld [vmem:[#allocation5 + $0x690] sm:$0xff]
    %v1396 = vld [vmem:[#allocation5 + $0x698] sm:$0xff]
    %v1397 = vld [vmem:[#allocation5 + $0x6a0] sm:$0xff]
    %v1398 = vld [vmem:[#allocation5 + $0x6a8] sm:$0xff]
    %v1399 = vld [vmem:[#allocation5 + $0x6b0] sm:$0xff]
    %v1400 = vld [vmem:[#allocation5 + $0x6b8] sm:$0xff]
    %v1401 = vld [vmem:[#allocation5 + $0x6c0] sm:$0xff]
    %v1402 = vld [vmem:[#allocation5 + $0x6c8] sm:$0xff]
    %v1403 = vld [vmem:[#allocation5 + $0x6d0] sm:$0xff]
    %v1404 = vld [vmem:[#allocation5 + $0x6d8] sm:$0xff]
    %v1405 = vld [vmem:[#allocation5 + $0x6e0] sm:$0xff]
    %v1406 = vld [vmem:[#allocation5 + $0x6e8] sm:$0xff]
    %v1407 = vld [vmem:[#allocation5 + $0x6f0] sm:$0xff]
    %v1408 = vld [vmem:[#allocation5 + $0x6f8] sm:$0xff]
    %v1409 = vld [vmem:[#allocation5 + $0x700] sm:$0xff]
    %v1410 = vld [vmem:[#allocation5 + $0x708] sm:$0xff]
    %v1411 = vld [vmem:[#allocation5 + $0x710] sm:$0xff]
    %v1412 = vld [vmem:[#allocation5 + $0x718] sm:$0xff]
    %v1413 = vld [vmem:[#allocation5 + $0x720] sm:$0xff]
    %v1414 = vld [vmem:[#allocation5 + $0x728] sm:$0xff]
    %v1415 = vld [vmem:[#allocation5 + $0x730] sm:$0xff]
    %v1416 = vld [vmem:[#allocation5 + $0x738] sm:$0xff]
    %v1417 = vld [vmem:[#allocation5 + $0x740] sm:$0xff]
    %v1418 = vld [vmem:[#allocation5 + $0x748] sm:$0xff]
    %v1419 = vld [vmem:[#allocation5 + $0x750] sm:$0xff]
    %v1420 = vld [vmem:[#allocation5 + $0x758] sm:$0xff]
    %v1421 = vld [vmem:[#allocation5 + $0x760] sm:$0xff]
    %v1422 = vld [vmem:[#allocation5 + $0x768] sm:$0xff]
    %v1423 = vld [vmem:[#allocation5 + $0x770] sm:$0xff]
    %v1424 = vld [vmem:[#allocation5 + $0x778] sm:$0xff]
    %v1425 = vld [vmem:[#allocation5 + $0x780] sm:$0xff]
    %v1426 = vld [vmem:[#allocation5 + $0x788] sm:$0xff]
    %v1427 = vld [vmem:[#allocation5 + $0x790] sm:$0xff]
    %v1428 = vld [vmem:[#allocation5 + $0x798] sm:$0xff]
    %v1429 = vld [vmem:[#allocation5 + $0x7a0] sm:$0xff]
    %v1430 = vld [vmem:[#allocation5 + $0x7a8] sm:$0xff]
    %v1431 = vld [vmem:[#allocation5 + $0x7b0] sm:$0xff]
    %v1432 = vld [vmem:[#allocation5 + $0x7b8] sm:$0xff]
    %v1433 = vld [vmem:[#allocation5 + $0x7c0] sm:$0xff]
    %v1434 = vld [vmem:[#allocation5 + $0x7c8] sm:$0xff]
    %v1435 = vld [vmem:[#allocation5 + $0x7d0] sm:$0xff]
    %v1436 = vld [vmem:[#allocation5 + $0x7d8] sm:$0xff]
    %v1437 = vld [vmem:[#allocation5 + $0x7e0] sm:$0xff]
    %v1438 = vld [vmem:[#allocation5 + $0x7e8] sm:$0xff]
    %v1439 = vld [vmem:[#allocation5 + $0x7f0] sm:$0xff]
    %v1440 = vld [vmem:[#allocation5 + $0x7f8] sm:$0xff]
    %v1441 = vld [vmem:[#allocation7] sm:$0xf]
    %v1443 = vperm.slane %v1441, 0
    %v1444 = vperm.slane %v1441, 1
    %v1445 = vperm.slane %v1441, 2
    %v1446 = vperm.slane %v1441, 3
    %1451 = vmatpush.msra.mxu0 %v1245
    %1452 = vmatpush.msra.mxu0 %v1241
    %1453 = vmatpush.msra.mxu0 %v1237
    %1454 = vmatpush.msra.mxu0 %v1233
    %1455 = vmatpush.msra.mxu0 %v1229
    %1456 = vmatpush.msra.mxu0 %v1225
    %1457 = vmatpush.msra.mxu0 %v1221
    %1458 = vmatpush.msra.mxu0 %v1217
    %1459 = vmatpush.msra.mxu0 %v1213
    %1460 = vmatpush.msra.mxu0 %v1209
    %1461 = vmatpush.msra.mxu0 %v1205
    %1462 = vmatpush.msra.mxu0 %v1201
    %1463 = vmatpush.msra.mxu0 %v1197
    %1464 = vmatpush.msra.mxu0 %v1193
    %1465 = vmatpush.msra.mxu0 %v1189
    %1466 = vmatpush.msra.mxu0 %v1185
    %1467 = vmatmul.f32.gmra.mxu0 %v763
    %v1468 = vpop.f32.mrf.mxu0
    %v1469 = vadd.f32 %v1443, %v1468
    %1470 = vdwg.mxu0
    %1471 = vmatpush.msra.mxu0 %v1309
    %1472 = vmatpush.msra.mxu0 %v1305
    %1473 = vmatpush.msra.mxu0 %v1301
    %1474 = vmatpush.msra.mxu0 %v1297
    %1475 = vmatpush.msra.mxu0 %v1293
    %1476 = vmatpush.msra.mxu0 %v1289
    %1477 = vmatpush.msra.mxu0 %v1285
    %1478 = vmatpush.msra.mxu0 %v1281
    %1479 = vmatpush.msra.mxu0 %v1277
    %1480 = vmatpush.msra.mxu0 %v1273
    %1481 = vmatpush.msra.mxu0 %v1269
    %1482 = vmatpush.msra.mxu0 %v1265
    %1483 = vmatpush.msra.mxu0 %v1261
    %1484 = vmatpush.msra.mxu0 %v1257
    %1485 = vmatpush.msra.mxu0 %v1253
    %1486 = vmatpush.msra.mxu0 %v1249
    %1487 = vmatmul.f32.gmra.mxu0 %v903
    %v1488 = vpop.f32.mrf.mxu0
    %v1489 = vadd.f32 %v1469, %v1488
    %1490 = vdwg.mxu0
    %1491 = vmatpush.msra.mxu0 %v1373
    %1492 = vmatpush.msra.mxu0 %v1369
    %1493 = vmatpush.msra.mxu0 %v1365
    %1494 = vmatpush.msra.mxu0 %v1361
    %1495 = vmatpush.msra.mxu0 %v1357
    %1496 = vmatpush.msra.mxu0 %v1353
    %1497 = vmatpush.msra.mxu0 %v1349
    %1498 = vmatpush.msra.mxu0 %v1345
    %1499 = vmatpush.msra.mxu0 %v1341
    %1500 = vmatpush.msra.mxu0 %v1337
    %1501 = vmatpush.msra.mxu0 %v1333
    %1502 = vmatpush.msra.mxu0 %v1329
    %1503 = vmatpush.msra.mxu0 %v1325
    %1504 = vmatpush.msra.mxu0 %v1321
    %1505 = vmatpush.msra.mxu0 %v1317
    %1506 = vmatpush.msra.mxu0 %v1313
    %1507 = vmatmul.f32.gmra.mxu0 %v1043
    %v1508 = vpop.f32.mrf.mxu0
    %v1509 = vadd.f32 %v1489, %v1508
    %1510 = vdwg.mxu0
    %1511 = vmatpush.msra.mxu0 %v1437
    %1512 = vmatpush.msra.mxu0 %v1433
    %1513 = vmatpush.msra.mxu0 %v1429
    %1514 = vmatpush.msra.mxu0 %v1425
    %1515 = vmatpush.msra.mxu0 %v1421
    %1516 = vmatpush.msra.mxu0 %v1417
    %1517 = vmatpush.msra.mxu0 %v1413
    %1518 = vmatpush.msra.mxu0 %v1409
    %1519 = vmatpush.msra.mxu0 %v1405
    %1520 = vmatpush.msra.mxu0 %v1401
    %1521 = vmatpush.msra.mxu0 %v1397
    %1522 = vmatpush.msra.mxu0 %v1393
    %1523 = vmatpush.msra.mxu0 %v1389
    %1524 = vmatpush.msra.mxu0 %v1385
    %1525 = vmatpush.msra.mxu0 %v1381
    %1526 = vmatpush.msra.mxu0 %v1377
    %1527 = vmatmul.f32.gmra.mxu0 %v1183
    %v1528 = vpop.f32.mrf.mxu0
    %v1529 = vadd.f32 %v1509, %v1528
    %1530 = vdwg.mxu0
    %1531 = vmatpush.msra.mxu0 %v1246
    %1532 = vmatpush.msra.mxu0 %v1242
    %1533 = vmatpush.msra.mxu0 %v1238
    %1534 = vmatpush.msra.mxu0 %v1234
    %1535 = vmatpush.msra.mxu0 %v1230
    %1536 = vmatpush.msra.mxu0 %v1226
    %1537 = vmatpush.msra.mxu0 %v1222
    %1538 = vmatpush.msra.mxu0 %v1218
    %1539 = vmatpush.msra.mxu0 %v1214
    %1540 = vmatpush.msra.mxu0 %v1210
    %1541 = vmatpush.msra.mxu0 %v1206
    %1542 = vmatpush.msra.mxu0 %v1202
    %1543 = vmatpush.msra.mxu0 %v1198
    %1544 = vmatpush.msra.mxu0 %v1194
    %1545 = vmatpush.msra.mxu0 %v1190
    %1546 = vmatpush.msra.mxu0 %v1186
    %1547 = vmatmul.f32.gmra.mxu0 %v763
    %v1548 = vpop.f32.mrf.mxu0
    %v1549 = vadd.f32 %v1444, %v1548
    %1550 = vdwg.mxu0
    %1551 = vmatpush.msra.mxu0 %v1310
    %1552 = vmatpush.msra.mxu0 %v1306
    %1553 = vmatpush.msra.mxu0 %v1302
    %1554 = vmatpush.msra.mxu0 %v1298
    %1555 = vmatpush.msra.mxu0 %v1294
    %1556 = vmatpush.msra.mxu0 %v1290
    %1557 = vmatpush.msra.mxu0 %v1286
    %1558 = vmatpush.msra.mxu0 %v1282
    %1559 = vmatpush.msra.mxu0 %v1278
    %1560 = vmatpush.msra.mxu0 %v1274
    %1561 = vmatpush.msra.mxu0 %v1270
    %1562 = vmatpush.msra.mxu0 %v1266
    %1563 = vmatpush.msra.mxu0 %v1262
    %1564 = vmatpush.msra.mxu0 %v1258
    %1565 = vmatpush.msra.mxu0 %v1254
    %1566 = vmatpush.msra.mxu0 %v1250
    %1567 = vmatmul.f32.gmra.mxu0 %v903
    %v1568 = vpop.f32.mrf.mxu0
    %v1569 = vadd.f32 %v1549, %v1568
    %1570 = vdwg.mxu0
    %1571 = vmatpush.msra.mxu0 %v1374
    %1572 = vmatpush.msra.mxu0 %v1370
    %1573 = vmatpush.msra.mxu0 %v1366
    %1574 = vmatpush.msra.mxu0 %v1362
    %1575 = vmatpush.msra.mxu0 %v1358
    %1576 = vmatpush.msra.mxu0 %v1354
    %1577 = vmatpush.msra.mxu0 %v1350
    %1578 = vmatpush.msra.mxu0 %v1346
    %1579 = vmatpush.msra.mxu0 %v1342
    %1580 = vmatpush.msra.mxu0 %v1338
    %1581 = vmatpush.msra.mxu0 %v1334
    %1582 = vmatpush.msra.mxu0 %v1330
    %1583 = vmatpush.msra.mxu0 %v1326
    %1584 = vmatpush.msra.mxu0 %v1322
    %1585 = vmatpush.msra.mxu0 %v1318
    %1586 = vmatpush.msra.mxu0 %v1314
    %1587 = vmatmul.f32.gmra.mxu0 %v1043
    %v1588 = vpop.f32.mrf.mxu0
    %v1589 = vadd.f32 %v1569, %v1588
    %1590 = vdwg.mxu0
    %1591 = vmatpush.msra.mxu0 %v1438
    %1592 = vmatpush.msra.mxu0 %v1434
    %1593 = vmatpush.msra.mxu0 %v1430
    %1594 = vmatpush.msra.mxu0 %v1426
    %1595 = vmatpush.msra.mxu0 %v1422
    %1596 = vmatpush.msra.mxu0 %v1418
    %1597 = vmatpush.msra.mxu0 %v1414
    %1598 = vmatpush.msra.mxu0 %v1410
    %1599 = vmatpush.msra.mxu0 %v1406
    %1600 = vmatpush.msra.mxu0 %v1402
    %1601 = vmatpush.msra.mxu0 %v1398
    %1602 = vmatpush.msra.mxu0 %v1394
    %1603 = vmatpush.msra.mxu0 %v1390
    %1604 = vmatpush.msra.mxu0 %v1386
    %1605 = vmatpush.msra.mxu0 %v1382
    %1606 = vmatpush.msra.mxu0 %v1378
    %1607 = vmatmul.f32.gmra.mxu0 %v1183
    %v1608 = vpop.f32.mrf.mxu0
    %v1609 = vadd.f32 %v1589, %v1608
    %1610 = vdwg.mxu0
    %1611 = vmatpush.msra.mxu0 %v1247
    %1612 = vmatpush.msra.mxu0 %v1243
    %1613 = vmatpush.msra.mxu0 %v1239
    %1614 = vmatpush.msra.mxu0 %v1235
    %1615 = vmatpush.msra.mxu0 %v1231
    %1616 = vmatpush.msra.mxu0 %v1227
    %1617 = vmatpush.msra.mxu0 %v1223
    %1618 = vmatpush.msra.mxu0 %v1219
    %1619 = vmatpush.msra.mxu0 %v1215
    %1620 = vmatpush.msra.mxu0 %v1211
    %1621 = vmatpush.msra.mxu0 %v1207
    %1622 = vmatpush.msra.mxu0 %v1203
    %1623 = vmatpush.msra.mxu0 %v1199
    %1624 = vmatpush.msra.mxu0 %v1195
    %1625 = vmatpush.msra.mxu0 %v1191
    %1626 = vmatpush.msra.mxu0 %v1187
    %1627 = vmatmul.f32.gmra.mxu0 %v763
    %v1628 = vpop.f32.mrf.mxu0
    %v1629 = vadd.f32 %v1445, %v1628
    %1630 = vdwg.mxu0
    %1631 = vmatpush.msra.mxu0 %v1311
    %1632 = vmatpush.msra.mxu0 %v1307
    %1633 = vmatpush.msra.mxu0 %v1303
    %1634 = vmatpush.msra.mxu0 %v1299
    %1635 = vmatpush.msra.mxu0 %v1295
    %1636 = vmatpush.msra.mxu0 %v1291
    %1637 = vmatpush.msra.mxu0 %v1287
    %1638 = vmatpush.msra.mxu0 %v1283
    %1639 = vmatpush.msra.mxu0 %v1279
    %1640 = vmatpush.msra.mxu0 %v1275
    %1641 = vmatpush.msra.mxu0 %v1271
    %1642 = vmatpush.msra.mxu0 %v1267
    %1643 = vmatpush.msra.mxu0 %v1263
    %1644 = vmatpush.msra.mxu0 %v1259
    %1645 = vmatpush.msra.mxu0 %v1255
    %1646 = vmatpush.msra.mxu0 %v1251
    %1647 = vmatmul.f32.gmra.mxu0 %v903
    %v1648 = vpop.f32.mrf.mxu0
    %v1649 = vadd.f32 %v1629, %v1648
    %1650 = vdwg.mxu0
    %1651 = vmatpush.msra.mxu0 %v1375
    %1652 = vmatpush.msra.mxu0 %v1371
    %1653 = vmatpush.msra.mxu0 %v1367
    %1654 = vmatpush.msra.mxu0 %v1363
    %1655 = vmatpush.msra.mxu0 %v1359
    %1656 = vmatpush.msra.mxu0 %v1355
    %1657 = vmatpush.msra.mxu0 %v1351
    %1658 = vmatpush.msra.mxu0 %v1347
    %1659 = vmatpush.msra.mxu0 %v1343
    %1660 = vmatpush.msra.mxu0 %v1339
    %1661 = vmatpush.msra.mxu0 %v1335
    %1662 = vmatpush.msra.mxu0 %v1331
    %1663 = vmatpush.msra.mxu0 %v1327
    %1664 = vmatpush.msra.mxu0 %v1323
    %1665 = vmatpush.msra.mxu0 %v1319
    %1666 = vmatpush.msra.mxu0 %v1315
    %1667 = vmatmul.f32.gmra.mxu0 %v1043
    %v1668 = vpop.f32.mrf.mxu0
    %v1669 = vadd.f32 %v1649, %v1668
    %1670 = vdwg.mxu0
    %1671 = vmatpush.msra.mxu0 %v1439
    %1672 = vmatpush.msra.mxu0 %v1435
    %1673 = vmatpush.msra.mxu0 %v1431
    %1674 = vmatpush.msra.mxu0 %v1427
    %1675 = vmatpush.msra.mxu0 %v1423
    %1676 = vmatpush.msra.mxu0 %v1419
    %1677 = vmatpush.msra.mxu0 %v1415
    %1678 = vmatpush.msra.mxu0 %v1411
    %1679 = vmatpush.msra.mxu0 %v1407
    %1680 = vmatpush.msra.mxu0 %v1403
    %1681 = vmatpush.msra.mxu0 %v1399
    %1682 = vmatpush.msra.mxu0 %v1395
    %1683 = vmatpush.msra.mxu0 %v1391
    %1684 = vmatpush.msra.mxu0 %v1387
    %1685 = vmatpush.msra.mxu0 %v1383
    %1686 = vmatpush.msra.mxu0 %v1379
    %1687 = vmatmul.f32.gmra.mxu0 %v1183
    %v1688 = vpop.f32.mrf.mxu0
    %v1689 = vadd.f32 %v1669, %v1688
    %1690 = vdwg.mxu0
    %1691 = vmatpush.msra.mxu0 %v1248
    %1692 = vmatpush.msra.mxu0 %v1244
    %1693 = vmatpush.msra.mxu0 %v1240
    %1694 = vmatpush.msra.mxu0 %v1236
    %1695 = vmatpush.msra.mxu0 %v1232
    %1696 = vmatpush.msra.mxu0 %v1228
    %1697 = vmatpush.msra.mxu0 %v1224
    %1698 = vmatpush.msra.mxu0 %v1220
    %1699 = vmatpush.msra.mxu0 %v1216
    %1700 = vmatpush.msra.mxu0 %v1212
    %1701 = vmatpush.msra.mxu0 %v1208
    %1702 = vmatpush.msra.mxu0 %v1204
    %1703 = vmatpush.msra.mxu0 %v1200
    %1704 = vmatpush.msra.mxu0 %v1196
    %1705 = vmatpush.msra.mxu0 %v1192
    %1706 = vmatpush.msra.mxu0 %v1188
    %1707 = vmatmul.f32.gmra.mxu0 %v763
    %v1708 = vpop.f32.mrf.mxu0
    %v1709 = vadd.f32 %v1446, %v1708
    %1710 = vdwg.mxu0
    %1711 = vmatpush.msra.mxu0 %v1312
    %1712 = vmatpush.msra.mxu0 %v1308
    %1713 = vmatpush.msra.mxu0 %v1304
    %1714 = vmatpush.msra.mxu0 %v1300
    %1715 = vmatpush.msra.mxu0 %v1296
    %1716 = vmatpush.msra.mxu0 %v1292
    %1717 = vmatpush.msra.mxu0 %v1288
    %1718 = vmatpush.msra.mxu0 %v1284
    %1719 = vmatpush.msra.mxu0 %v1280
    %1720 = vmatpush.msra.mxu0 %v1276
    %1721 = vmatpush.msra.mxu0 %v1272
    %1722 = vmatpush.msra.mxu0 %v1268
    %1723 = vmatpush.msra.mxu0 %v1264
    %1724 = vmatpush.msra.mxu0 %v1260
    %1725 = vmatpush.msra.mxu0 %v1256
    %1726 = vmatpush.msra.mxu0 %v1252
    %1727 = vmatmul.f32.gmra.mxu0 %v903
    %v1728 = vpop.f32.mrf.mxu0
    %v1729 = vadd.f32 %v1709, %v1728
    %1730 = vdwg.mxu0
    %1731 = vmatpush.msra.mxu0 %v1376
    %1732 = vmatpush.msra.mxu0 %v1372
    %1733 = vmatpush.msra.mxu0 %v1368
    %1734 = vmatpush.msra.mxu0 %v1364
    %1735 = vmatpush.msra.mxu0 %v1360
    %1736 = vmatpush.msra.mxu0 %v1356
    %1737 = vmatpush.msra.mxu0 %v1352
    %1738 = vmatpush.msra.mxu0 %v1348
    %1739 = vmatpush.msra.mxu0 %v1344
    %1740 = vmatpush.msra.mxu0 %v1340
    %1741 = vmatpush.msra.mxu0 %v1336
    %1742 = vmatpush.msra.mxu0 %v1332
    %1743 = vmatpush.msra.mxu0 %v1328
    %1744 = vmatpush.msra.mxu0 %v1324
    %1745 = vmatpush.msra.mxu0 %v1320
    %1746 = vmatpush.msra.mxu0 %v1316
    %1747 = vmatmul.f32.gmra.mxu0 %v1043
    %v1748 = vpop.f32.mrf.mxu0
    %v1749 = vadd.f32 %v1729, %v1748
    %1750 = vdwg.mxu0
    %1751 = vmatpush.msra.mxu0 %v1440
    %1752 = vmatpush.msra.mxu0 %v1436
    %1753 = vmatpush.msra.mxu0 %v1432
    %1754 = vmatpush.msra.mxu0 %v1428
    %1755 = vmatpush.msra.mxu0 %v1424
    %1756 = vmatpush.msra.mxu0 %v1420
    %1757 = vmatpush.msra.mxu0 %v1416
    %1758 = vmatpush.msra.mxu0 %v1412
    %1759 = vmatpush.msra.mxu0 %v1408
    %1760 = vmatpush.msra.mxu0 %v1404
    %1761 = vmatpush.msra.mxu0 %v1400
    %1762 = vmatpush.msra.mxu0 %v1396
    %1763 = vmatpush.msra.mxu0 %v1392
    %1764 = vmatpush.msra.mxu0 %v1388
    %1765 = vmatpush.msra.mxu0 %v1384
    %1766 = vmatpush.msra.mxu0 %v1380
    %1767 = vmatmul.f32.gmra.mxu0 %v1183
    %v1768 = vpop.f32.mrf.mxu0
    %v1769 = vadd.f32 %v1749, %v1768
    %1770 = vdwg.mxu0
    %v1771 = vmax.f32 %v1529, 0.0
    %v1772 = vmax.f32 %v1609, 0.0
    %v1773 = vmax.f32 %v1689, 0.0
    %v1774 = vmax.f32 %v1769, 0.0
    %v1775 = vld [vmem:[#allocation8] sm:$0xff]
    %v1776 = vld [vmem:[#allocation8 + $0x8] sm:$0xff]
    %v1777 = vld [vmem:[#allocation8 + $0x10] sm:$0xff]
    %v1778 = vld [vmem:[#allocation8 + $0x18] sm:$0xff]
    %v1779 = vld [vmem:[#allocation8 + $0x20] sm:$0xff]
    %v1780 = vld [vmem:[#allocation8 + $0x28] sm:$0xff]
    %v1781 = vld [vmem:[#allocation8 + $0x30] sm:$0xff]
    %v1782 = vld [vmem:[#allocation8 + $0x38] sm:$0xff]
    %v1783 = vld [vmem:[#allocation8 + $0x40] sm:$0xff]
    %v1784 = vld [vmem:[#allocation8 + $0x48] sm:$0xff]
    %v1785 = vld [vmem:[#allocation8 + $0x50] sm:$0xff]
    %v1786 = vld [vmem:[#allocation8 + $0x58] sm:$0xff]
    %v1787 = vld [vmem:[#allocation8 + $0x60] sm:$0xff]
    %v1788 = vld [vmem:[#allocation8 + $0x68] sm:$0xff]
    %v1789 = vld [vmem:[#allocation8 + $0x70] sm:$0xff]
    %v1790 = vld [vmem:[#allocation8 + $0x78] sm:$0xff]
    %v1791 = vld [vmem:[#allocation8 + $0x80] sm:$0xff]
    %v1792 = vld [vmem:[#allocation8 + $0x88] sm:$0xff]
    %v1793 = vld [vmem:[#allocation8 + $0x90] sm:$0xff]
    %v1794 = vld [vmem:[#allocation8 + $0x98] sm:$0xff]
    %v1795 = vld [vmem:[#allocation8 + $0xa0] sm:$0xff]
    %v1796 = vld [vmem:[#allocation8 + $0xa8] sm:$0xff]
    %v1797 = vld [vmem:[#allocation8 + $0xb0] sm:$0xff]
    %v1798 = vld [vmem:[#allocation8 + $0xb8] sm:$0xff]
    %v1799 = vld [vmem:[#allocation8 + $0xc0] sm:$0xff]
    %v1800 = vld [vmem:[#allocation8 + $0xc8] sm:$0xff]
    %v1801 = vld [vmem:[#allocation8 + $0xd0] sm:$0xff]
    %v1802 = vld [vmem:[#allocation8 + $0xd8] sm:$0xff]
    %v1803 = vld [vmem:[#allocation8 + $0xe0] sm:$0xff]
    %v1804 = vld [vmem:[#allocation8 + $0xe8] sm:$0xff]
    %v1805 = vld [vmem:[#allocation8 + $0xf0] sm:$0xff]
    %v1806 = vld [vmem:[#allocation8 + $0xf8] sm:$0xff]
    %v1807 = vld [vmem:[#allocation8 + $0x100] sm:$0xff]
    %v1808 = vld [vmem:[#allocation8 + $0x108] sm:$0xff]
    %v1809 = vld [vmem:[#allocation8 + $0x110] sm:$0xff]
    %v1810 = vld [vmem:[#allocation8 + $0x118] sm:$0xff]
    %v1811 = vld [vmem:[#allocation8 + $0x120] sm:$0xff]
    %v1812 = vld [vmem:[#allocation8 + $0x128] sm:$0xff]
    %v1813 = vld [vmem:[#allocation8 + $0x130] sm:$0xff]
    %v1814 = vld [vmem:[#allocation8 + $0x138] sm:$0xff]
    %v1815 = vld [vmem:[#allocation8 + $0x140] sm:$0xff]
    %v1816 = vld [vmem:[#allocation8 + $0x148] sm:$0xff]
    %v1817 = vld [vmem:[#allocation8 + $0x150] sm:$0xff]
    %v1818 = vld [vmem:[#allocation8 + $0x158] sm:$0xff]
    %v1819 = vld [vmem:[#allocation8 + $0x160] sm:$0xff]
    %v1820 = vld [vmem:[#allocation8 + $0x168] sm:$0xff]
    %v1821 = vld [vmem:[#allocation8 + $0x170] sm:$0xff]
    %v1822 = vld [vmem:[#allocation8 + $0x178] sm:$0xff]
    %v1823 = vld [vmem:[#allocation8 + $0x180] sm:$0xff]
    %v1824 = vld [vmem:[#allocation8 + $0x188] sm:$0xff]
    %v1825 = vld [vmem:[#allocation8 + $0x190] sm:$0xff]
    %v1826 = vld [vmem:[#allocation8 + $0x198] sm:$0xff]
    %v1827 = vld [vmem:[#allocation8 + $0x1a0] sm:$0xff]
    %v1828 = vld [vmem:[#allocation8 + $0x1a8] sm:$0xff]
    %v1829 = vld [vmem:[#allocation8 + $0x1b0] sm:$0xff]
    %v1830 = vld [vmem:[#allocation8 + $0x1b8] sm:$0xff]
    %v1831 = vld [vmem:[#allocation8 + $0x1c0] sm:$0xff]
    %v1832 = vld [vmem:[#allocation8 + $0x1c8] sm:$0xff]
    %v1833 = vld [vmem:[#allocation8 + $0x1d0] sm:$0xff]
    %v1834 = vld [vmem:[#allocation8 + $0x1d8] sm:$0xff]
    %v1835 = vld [vmem:[#allocation8 + $0x1e0] sm:$0xff]
    %v1836 = vld [vmem:[#allocation8 + $0x1e8] sm:$0xff]
    %v1837 = vld [vmem:[#allocation8 + $0x1f0] sm:$0xff]
    %v1838 = vld [vmem:[#allocation8 + $0x1f8] sm:$0xff]
    %1839 = vmatpush.msra.mxu0 %v1790
    %1840 = vmatpush.msra.mxu0 %v1789
    %1841 = vmatpush.msra.mxu0 %v1788
    %1842 = vmatpush.msra.mxu0 %v1787
    %1843 = vmatpush.msra.mxu0 %v1786
    %1844 = vmatpush.msra.mxu0 %v1785
    %1845 = vmatpush.msra.mxu0 %v1784
    %1846 = vmatpush.msra.mxu0 %v1783
    %1847 = vmatpush.msra.mxu0 %v1782
    %1848 = vmatpush.msra.mxu0 %v1781
    %1849 = vmatpush.msra.mxu0 %v1780
    %1850 = vmatpush.msra.mxu0 %v1779
    %1851 = vmatpush.msra.mxu0 %v1778
    %1852 = vmatpush.msra.mxu0 %v1777
    %1853 = vmatpush.msra.mxu0 %v1776
    %1854 = vmatpush.msra.mxu0 %v1775
    %1855 = vmatmul.f32.gmra.mxu0 %v1771
    %v1856 = vpop.f32.mrf.mxu0
    %v1857 = vadd.f32 0.0, %v1856
    %1858 = vdwg.mxu0
    %1859 = vmatpush.msra.mxu0 %v1806
    %1860 = vmatpush.msra.mxu0 %v1805
    %1861 = vmatpush.msra.mxu0 %v1804
    %1862 = vmatpush.msra.mxu0 %v1803
    %1863 = vmatpush.msra.mxu0 %v1802
    %1864 = vmatpush.msra.mxu0 %v1801
    %1865 = vmatpush.msra.mxu0 %v1800
    %1866 = vmatpush.msra.mxu0 %v1799
    %1867 = vmatpush.msra.mxu0 %v1798
    %1868 = vmatpush.msra.mxu0 %v1797
    %1869 = vmatpush.msra.mxu0 %v1796
    %1870 = vmatpush.msra.mxu0 %v1795
    %1871 = vmatpush.msra.mxu0 %v1794
    %1872 = vmatpush.msra.mxu0 %v1793
    %1873 = vmatpush.msra.mxu0 %v1792
    %1874 = vmatpush.msra.mxu0 %v1791
    %1875 = vmatmul.f32.gmra.mxu0 %v1772
    %v1876 = vpop.f32.mrf.mxu0
    %v1877 = vadd.f32 %v1857, %v1876
    %1878 = vdwg.mxu0
    %1879 = vmatpush.msra.mxu0 %v1822
    %1880 = vmatpush.msra.mxu0 %v1821
    %1881 = vmatpush.msra.mxu0 %v1820
    %1882 = vmatpush.msra.mxu0 %v1819
    %1883 = vmatpush.msra.mxu0 %v1818
    %1884 = vmatpush.msra.mxu0 %v1817
    %1885 = vmatpush.msra.mxu0 %v1816
    %1886 = vmatpush.msra.mxu0 %v1815
    %1887 = vmatpush.msra.mxu0 %v1814
    %1888 = vmatpush.msra.mxu0 %v1813
    %1889 = vmatpush.msra.mxu0 %v1812
    %1890 = vmatpush.msra.mxu0 %v1811
    %1891 = vmatpush.msra.mxu0 %v1810
    %1892 = vmatpush.msra.mxu0 %v1809
    %1893 = vmatpush.msra.mxu0 %v1808
    %1894 = vmatpush.msra.mxu0 %v1807
    %1895 = vmatmul.f32.gmra.mxu0 %v1773
    %v1896 = vpop.f32.mrf.mxu0
    %v1897 = vadd.f32 %v1877, %v1896
    %1898 = vdwg.mxu0
    %1899 = vmatpush.msra.mxu0 %v1838
    %1900 = vmatpush.msra.mxu0 %v1837
    %1901 = vmatpush.msra.mxu0 %v1836
    %1902 = vmatpush.msra.mxu0 %v1835
    %1903 = vmatpush.msra.mxu0 %v1834
    %1904 = vmatpush.msra.mxu0 %v1833
    %1905 = vmatpush.msra.mxu0 %v1832
    %1906 = vmatpush.msra.mxu0 %v1831
    %1907 = vmatpush.msra.mxu0 %v1830
    %1908 = vmatpush.msra.mxu0 %v1829
    %1909 = vmatpush.msra.mxu0 %v1828
    %1910 = vmatpush.msra.mxu0 %v1827
    %1911 = vmatpush.msra.mxu0 %v1826
    %1912 = vmatpush.msra.mxu0 %v1825
    %1913 = vmatpush.msra.mxu0 %v1824
    %1914 = vmatpush.msra.mxu0 %v1823
    %1915 = vmatmul.f32.gmra.mxu0 %v1774
    %v1916 = vpop.f32.mrf.mxu0
    %v1917 = vadd.f32 %v1897, %v1916
    %1918 = vdwg.mxu0
    %v1919 = vld [vmem:[#allocation10] sm:$0xff]
    %v1920 = vld [vmem:[#allocation10 + $0x8] sm:$0xff]
    %v1921 = vld [vmem:[#allocation10 + $0x10] sm:$0xff]
    %v1922 = vld [vmem:[#allocation10 + $0x18] sm:$0xff]
    %v1923 = vld [vmem:[#allocation10 + $0x20] sm:$0xff]
    %v1924 = vld [vmem:[#allocation10 + $0x28] sm:$0xff]
    %v1925 = vld [vmem:[#allocation10 + $0x30] sm:$0xff]
    %v1926 = vld [vmem:[#allocation10 + $0x38] sm:$0xff]
    %v1927 = vld [vmem:[#allocation10 + $0x40] sm:$0xff]
    %v1928 = vld [vmem:[#allocation10 + $0x48] sm:$0xff]
    %v1929 = vld [vmem:[#allocation10 + $0x50] sm:$0xff]
    %v1930 = vld [vmem:[#allocation10 + $0x58] sm:$0xff]
    %v1931 = vld [vmem:[#allocation10 + $0x60] sm:$0xff]
    %v1932 = vld [vmem:[#allocation10 + $0x68] sm:$0xff]
    %v1933 = vld [vmem:[#allocation10 + $0x70] sm:$0xff]
    %v1934 = vld [vmem:[#allocation10 + $0x78] sm:$0xff]
    %v1935 = vld [vmem:[#allocation11] sm:$0x1]
    %v1937 = vperm.slane %v1935, 0
    %1939 = vmatpush.msra.mxu0 %v1934
    %1940 = vmatpush.msra.mxu0 %v1933
    %1941 = vmatpush.msra.mxu0 %v1932
    %1942 = vmatpush.msra.mxu0 %v1931
    %1943 = vmatpush.msra.mxu0 %v1930
    %1944 = vmatpush.msra.mxu0 %v1929
    %1945 = vmatpush.msra.mxu0 %v1928
    %1946 = vmatpush.msra.mxu0 %v1927
    %1947 = vmatpush.msra.mxu0 %v1926
    %1948 = vmatpush.msra.mxu0 %v1925
    %1949 = vmatpush.msra.mxu0 %v1924
    %1950 = vmatpush.msra.mxu0 %v1923
    %1951 = vmatpush.msra.mxu0 %v1922
    %1952 = vmatpush.msra.mxu0 %v1921
    %1953 = vmatpush.msra.mxu0 %v1920
    %1954 = vmatpush.msra.mxu0 %v1919
    %1955 = vmatmul.f32.gmra.mxu0 %v1917
    %v1956 = vpop.f32.mrf.mxu0
    %v1957 = vadd.f32 %v1937, %v1956
    %1958 = vdwg.mxu0
    %v1959 = vmax.f32 %v1957, 0.0
    %v1960 = vld [vmem:[#allocation13] sm:$0xff]
    %v1961 = vld [vmem:[#allocation13 + $0x8] sm:$0xff]
    %v1962 = vld [vmem:[#allocation13 + $0x10] sm:$0xff]
    %v1963 = vld [vmem:[#allocation13 + $0x18] sm:$0xff]
    %v1964 = vld [vmem:[#allocation13 + $0x20] sm:$0xff]
    %v1965 = vld [vmem:[#allocation13 + $0x28] sm:$0xff]
    %v1966 = vld [vmem:[#allocation13 + $0x30] sm:$0xff]
    %v1967 = vld [vmem:[#allocation13 + $0x38] sm:$0xff]
    %v1968 = vld [vmem:[#allocation13 + $0x40] sm:$0xff]
    %v1969 = vld [vmem:[#allocation13 + $0x48] sm:$0xff]
    %v1970 = vld [vmem:[#allocation13 + $0x50] sm:$0xff]
    %v1971 = vld [vmem:[#allocation13 + $0x58] sm:$0xff]
    %v1972 = vld [vmem:[#allocation13 + $0x60] sm:$0xff]
    %v1973 = vld [vmem:[#allocation13 + $0x68] sm:$0xff]
    %v1974 = vld [vmem:[#allocation13 + $0x70] sm:$0xff]
    %v1975 = vld [vmem:[#allocation13 + $0x78] sm:$0xff]
    %1976 = vmatpush.msra.mxu0 %v1975
    %1977 = vmatpush.msra.mxu0 %v1974
    %1978 = vmatpush.msra.mxu0 %v1973
    %1979 = vmatpush.msra.mxu0 %v1972
    %1980 = vmatpush.msra.mxu0 %v1971
    %1981 = vmatpush.msra.mxu0 %v1970
    %1982 = vmatpush.msra.mxu0 %v1969
    %1983 = vmatpush.msra.mxu0 %v1968
    %1984 = vmatpush.msra.mxu0 %v1967
    %1985 = vmatpush.msra.mxu0 %v1966
    %1986 = vmatpush.msra.mxu0 %v1965
    %1987 = vmatpush.msra.mxu0 %v1964
    %1988 = vmatpush.msra.mxu0 %v1963
    %1989 = vmatpush.msra.mxu0 %v1962
    %1990 = vmatpush.msra.mxu0 %v1961
    %1991 = vmatpush.msra.mxu0 %v1960
    %1992 = vmatmul.f32.gmra.mxu0 %v1959
    %v1993 = vpop.f32.mrf.mxu0
    %v1994 = vadd.f32 0.0, %v1993
    %1995 = vdwg.mxu0
    %v1996 = vld [vmem:[#allocation14] sm:$0xff]
    %v1997 = vld [vmem:[#allocation14 + $0x8] sm:$0xff]
    %v1998 = vld [vmem:[#allocation14 + $0x10] sm:$0xff]
    %v1999 = vld [vmem:[#allocation14 + $0x18] sm:$0xff]
    %v2000 = vld [vmem:[#allocation14 + $0x20] sm:$0xff]
    %v2001 = vld [vmem:[#allocation14 + $0x28] sm:$0xff]
    %v2002 = vld [vmem:[#allocation14 + $0x30] sm:$0xff]
    %v2003 = vld [vmem:[#allocation14 + $0x38] sm:$0xff]
    %v2004 = vld [vmem:[#allocation14 + $0x40] sm:$0xff]
    %v2005 = vld [vmem:[#allocation14 + $0x48] sm:$0xff]
    %v2006 = vld [vmem:[#allocation14 + $0x50] sm:$0xff]
    %v2007 = vld [vmem:[#allocation14 + $0x58] sm:$0xff]
    %v2008 = vld [vmem:[#allocation14 + $0x60] sm:$0xff]
    %v2009 = vld [vmem:[#allocation14 + $0x68] sm:$0xff]
    %v2010 = vld [vmem:[#allocation14 + $0x70] sm:$0xff]
    %v2011 = vld [vmem:[#allocation14 + $0x78] sm:$0xff]
    %v2012 = vld [vmem:[#allocation16] sm:$0x1]
    %v2014 = vperm.slane %v2012, 0
    %2016 = vmatpush.msra.mxu0 %v2011
    %2017 = vmatpush.msra.mxu0 %v2010
    %2018 = vmatpush.msra.mxu0 %v2009
    %2019 = vmatpush.msra.mxu0 %v2008
    %2020 = vmatpush.msra.mxu0 %v2007
    %2021 = vmatpush.msra.mxu0 %v2006
    %2022 = vmatpush.msra.mxu0 %v2005
    %2023 = vmatpush.msra.mxu0 %v2004
    %2024 = vmatpush.msra.mxu0 %v2003
    %2025 = vmatpush.msra.mxu0 %v2002
    %2026 = vmatpush.msra.mxu0 %v2001
    %2027 = vmatpush.msra.mxu0 %v2000
    %2028 = vmatpush.msra.mxu0 %v1999
    %2029 = vmatpush.msra.mxu0 %v1998
    %2030 = vmatpush.msra.mxu0 %v1997
    %2031 = vmatpush.msra.mxu0 %v1996
    %2032 = vmatmul.f32.gmra.mxu0 %v1994
    %v2033 = vpop.f32.mrf.mxu0
    %v2034 = vadd.f32 %v2014, %v2033
    %2035 = vdwg.mxu0
    %2036 = vmax.xlane.f32.xlu0 %v2034
    %v2037 = vpop.xlane.xlu0 %2036
    %v2038 = vsub.f32 %v2034, %v2037
    %v2039 = vmul.f32 %v2038, 1.442695
    %v2040 = vpow.pop %v2039
    %2041 = vadd.xlane.f32.xlu0 %v2040
    %v2042 = vpop.xlane.xlu0 %2041
    %v2043 = vlog2.pop %v2042
    %v2044 = vmul.f32 %v2043, 0.6931472
    %v2045 = vadd.f32 %v2037, %v2044
    %v2046 = vsub.f32 %v2034, %v2045
    %2047 = vst [vmem:[#allocation17] sm:$0xff] %v2046
    // Predicated region
    $region78: #{net_forward.1} parent=1 // pred_check
      _
    $region79: #{net_forward.1} parent=1 // pred_check_branch
      %2049 = sbr.rel (0) target = $region81
    $region80: #{net_forward.1} parent=1 // pred_region
      %2051 = vsyncadd [#allocation4], 0
      %s2053 = sshll.u32 [#allocation17], 4
      %s2054 = int_to_ptr.vmem [resolvable:$true] %s2053
      %s2055 = sshll.u32 %s10, 4
      %s2056 = int_to_ptr.hbm [resolvable:$true] %s2055
      %2058 = dma.vmem_to_hbm [thread:$0]  %s2054, 128, %s2056, [#allocation4]
    $region81: #{net_forward.1} parent=1 // pred_fallthru
      _
    // Predicated region
    $region82: #{net_forward.1} parent=1 // pred_check
      _
    $region83: #{net_forward.1} parent=1 // pred_check_branch
      %2060 = sbr.rel (0) target = $region85
    $region84: #{net_forward.1} parent=1 // pred_region
      %2062 = dma.done [#allocation4], 128
    $region85: #{net_forward.1} parent=1 // pred_fallthru
      _
    %2063 = vsyncpa [#allocation3], 1
    %2064 = vsyncpa [#allocation6], 1
    %2065 = vsyncpa [#allocation9], 1
    %2066 = vsyncpa [#allocation12], 1
    %2067 = vsyncpa [#allocation15], 1
    %2068 = vsyncpa [#allocation4], 1

</llo_original>
